<compile_context>
chip_gen: v7x
topology: tpu7x:2x2x1
jax: 0.10.0
libtpu: 0.0.40
codegen_flags: <defaults>
</compile_context>

<pallas_src>
import functools

import numpy as np
import jax
import jax.numpy as jnp
from jax.experimental import pallas as pl
from jax.experimental.pallas import tpu as pltpu


def _bilinear_matrix(in_size: int, out_size: int) -> np.ndarray:
    """(out_size, in_size) matrix reproducing PyTorch F.interpolate(mode='bilinear',
    align_corners=False) along one axis (half-pixel centers, clamped at the edges)."""
    scale = in_size / out_size
    m = np.zeros((out_size, in_size), dtype=np.float32)
    for i in range(out_size):
        src = (i + 0.5) * scale - 0.5
        if src < 0.0:
            src = 0.0
        i0 = min(int(np.floor(src)), in_size - 1)
        i1 = min(i0 + 1, in_size - 1)
        lam = src - i0
        m[i, i0] += 1.0 - lam
        m[i, i1] += lam
    return m


# 3x3 conv tap offsets, k = (dh+1)*3 + (dw+1) = kh*3 + kw
_OFFSETS = [(dh, dw) for dh in (-1, 0, 1) for dw in (-1, 0, 1)]


def _psp_upsample_kernel(x_ref, ukT_ref, w2_ref, mask_ref, scale_ref, shift_ref,
                         alpha_ref, o_ref, im2col_ref, *, cin, wout, s):
    # ---- bilinear x2 upsample: one MXU matmul, lane-dense (Cin, S) result ----
    p = jnp.dot(x_ref[0], ukT_ref[...], preferred_element_type=jnp.float32)   # (Cin, S)
    masks = mask_ref[...]                                                      # (9, S)

    # ---- build im2col (9*Cin, S): row k*Cin+ci is tap (dh,dw) of channel ci ----
    # Shifts are static lane slices of the flat axis; edge masks zero the positions
    # that correspond to the conv's zero padding (including the flat W wrap-around).
    for k, (dh, dw) in enumerate(_OFFSETS):
        delta = dh * wout + dw
        a = max(0, -delta)          # valid destination range [a, b)
        b = min(s, s - delta)
        r0, r1 = k * cin, (k + 1) * cin
        if a > 0:                   # tiny border strips -> zero (conv zero padding)
            im2col_ref[r0:r1, 0:a] = jnp.zeros((cin, a), jnp.float32)
        if b < s:
            im2col_ref[r0:r1, b:s] = jnp.zeros((cin, s - b), jnp.float32)
        im2col_ref[r0:r1, a:b] = p[:, a + delta:b + delta] * masks[k:k + 1, a:b]

    # ---- 3x3 conv as one MXU matmul + fused BN affine + PReLU, lane-dense store ----
    y = jnp.dot(w2_ref[...], im2col_ref[...],
                preferred_element_type=jnp.float32)                            # (Cout, S)
    y = y * scale_ref[...] + shift_ref[...]        # conv bias + BatchNorm folded
    alpha = alpha_ref[0]
    o_ref[0] = jnp.where(y > 0.0, y, alpha * y)    # PReLU (single shared alpha)


def psp_upsample(x, conv_w, conv_b, bn_gamma, bn_beta, bn_mean, bn_var,
                 prelu_alpha, eps=1e-5):
    n, cin, h, w = x.shape
    cout = conv_w.shape[0]
    hout, wout = 2 * h, 2 * w
    s_in, s_out = h * w, hout * wout

    # Upsample as a single matrix on the flattened spatial axes: p = x_flat @ kron(Wh,Ww)^T
    wh = _bilinear_matrix(h, hout)                       # (Hout, H)
    ww = _bilinear_matrix(w, wout)                       # (Wout, W)
    ukT = jnp.asarray(np.kron(wh, ww).T)                 # (H*W, Hout*Wout)

    # Edge masks for the 9 conv taps in flattened (Hout*Wout) space.
    oh = np.arange(hout)[:, None]
    ow = np.arange(wout)[None, :]
    masks_np = np.zeros((9, s_out), np.float32)
    for k, (dh, dw) in enumerate(_OFFSETS):
        m = ((oh + dh >= 0) & (oh + dh < hout) &
             (ow + dw >= 0) & (ow + dw < wout))
        masks_np[k] = m.astype(np.float32).reshape(-1)
    masks = jnp.asarray(masks_np)

    # Conv weight rearranged to (Cout, 9*Cin), matching im2col row order (k, ci).
    w2 = jnp.transpose(conv_w, (0, 2, 3, 1)).reshape(cout, 9 * cin).astype(jnp.float32)

    # Fold conv bias + BatchNorm(eval) into a per-channel affine (VMEM column vectors).
    bn_scale = bn_gamma / jnp.sqrt(bn_var + eps)
    scale = bn_scale.reshape(cout, 1).astype(jnp.float32)
    shift = (bn_scale * (conv_b - bn_mean) + bn_beta).reshape(cout, 1).astype(jnp.float32)
    alpha = jnp.reshape(prelu_alpha, (1,)).astype(jnp.float32)

    x_flat = x.reshape(n, cin, s_in).astype(jnp.float32)

    kernel = functools.partial(_psp_upsample_kernel, cin=cin, wout=wout, s=s_out)
    smem = pl.BlockSpec(memory_space=pltpu.MemorySpace.SMEM)

    flops = 2 * n * (cin * s_in * s_out + cout * 9 * cin * s_out) + 6 * n * cout * s_out
    bytes_accessed = 4 * (n * cin * s_in + s_in * s_out + cout * 9 * cin
                          + 9 * s_out + 2 * cout + n * cout * s_out)

    out_flat = pl.pallas_call(
        kernel,
        out_shape=jax.ShapeDtypeStruct((n, cout, s_out), jnp.float32),
        grid=(n,),
        in_specs=[
            pl.BlockSpec((1, cin, s_in), lambda i: (i, 0, 0)),    # x (one image, flat)
            pl.BlockSpec((s_in, s_out), lambda i: (0, 0)),        # kron upsample matrix
            pl.BlockSpec((cout, 9 * cin), lambda i: (0, 0)),      # conv weight (im2col form)
            pl.BlockSpec((9, s_out), lambda i: (0, 0)),           # tap edge masks
            pl.BlockSpec((cout, 1), lambda i: (0, 0)),            # folded BN scale
            pl.BlockSpec((cout, 1), lambda i: (0, 0)),            # folded BN shift
            smem,                                                 # prelu alpha (scalar)
        ],
        out_specs=pl.BlockSpec((1, cout, s_out), lambda i: (i, 0, 0)),
        scratch_shapes=[pltpu.VMEM((9 * cin, s_out), jnp.float32)],   # im2col buffer
        compiler_params=pltpu.CompilerParams(dimension_semantics=("parallel",)),
        cost_estimate=pl.CostEstimate(flops=flops, transcendentals=0,
                                      bytes_accessed=bytes_accessed),
    )(x_flat, ukT, w2, masks, scale, shift, alpha)

    return out_flat.reshape(n, cout, hout, wout)


def psp_upsample_ref(x, conv_w, conv_b, bn_gamma, bn_beta, bn_mean, bn_var,
                     prelu_alpha, eps=1e-5):
    """Pure-JAX reference (per-axis interpolation matrices, lax.conv)."""
    n, cin, h, w = x.shape
    hout, wout = 2 * h, 2 * w
    wh = jnp.asarray(_bilinear_matrix(h, hout))
    ww = jnp.asarray(_bilinear_matrix(w, wout))
    p = jnp.einsum('oh,nchw->ncow', wh, x)
    p = jnp.einsum('ncow,vw->ncov', p, ww)
    y = jax.lax.conv_general_dilated(p, conv_w, (1, 1), 'SAME',
                                     dimension_numbers=('NCHW', 'OIHW', 'NCHW'))
    y = y + conv_b[None, :, None, None]
    y = ((y - bn_mean[None, :, None, None]) /
         jnp.sqrt(bn_var + eps)[None, :, None, None] *
         bn_gamma[None, :, None, None] + bn_beta[None, :, None, None])
    return jnp.where(y > 0, y, prelu_alpha * y)


if __name__ == "__main__":
    N, CIN, COUT, H, W = 2, 4, 8, 16, 16

    key = jax.random.PRNGKey(0)
    ks = jax.random.split(key, 7)
    x = jax.random.normal(ks[0], (N, CIN, H, W), jnp.float32)
    conv_w = 0.1 * jax.random.normal(ks[1], (COUT, CIN, 3, 3), jnp.float32)
    conv_b = 0.1 * jax.random.normal(ks[2], (COUT,), jnp.float32)
    bn_gamma = 1.0 + 0.1 * jax.random.normal(ks[3], (COUT,), jnp.float32)
    bn_beta = 0.1 * jax.random.normal(ks[4], (COUT,), jnp.float32)
    bn_mean = 0.1 * jax.random.normal(ks[5], (COUT,), jnp.float32)
    bn_var = jnp.abs(1.0 + 0.1 * jax.random.normal(ks[6], (COUT,), jnp.float32))
    prelu_alpha = jnp.float32(0.25)  # PyTorch PReLU default init

    out = psp_upsample(x, conv_w, conv_b, bn_gamma, bn_beta, bn_mean, bn_var, prelu_alpha)
    out = jax.block_until_ready(out)

    assert out.shape == (N, COUT, 2 * H, 2 * W) and out.dtype == jnp.float32
    ref = psp_upsample_ref(x, conv_w, conv_b, bn_gamma, bn_beta, bn_mean, bn_var, prelu_alpha)
    err = float(jnp.max(jnp.abs(out - ref)))
    assert jnp.allclose(out, ref, atol=1e-2, rtol=1e-2), f"max abs err {err}"

    print("KERNEL_OK")
</pallas_src>

<mosaic_0001>
module attributes {stable_mosaic.version = 11 : i64} {
  func.func @_psp_upsample_kernel(%arg0: i32, %arg1: memref<1x4x256xf32, #tpu.memory_space<vmem>>, %arg2: memref<256x1024xf32, #tpu.memory_space<vmem>>, %arg3: memref<8x36xf32, #tpu.memory_space<vmem>>, %arg4: memref<9x1024xf32, #tpu.memory_space<vmem>>, %arg5: memref<8x1xf32, #tpu.memory_space<vmem>>, %arg6: memref<8x1xf32, #tpu.memory_space<vmem>>, %arg7: memref<1xf32, #tpu.memory_space<smem>>, %arg8: memref<1x8x1024xf32, #tpu.memory_space<vmem>>, %arg9: memref<36x1024xf32, #tpu.memory_space<vmem>>) attributes {dimension_semantics = [#tpu.dimension_semantics<parallel>], iteration_bounds = array<i64: 2>, scalar_prefetch = 0 : i64, scratch_operands = 1 : i64, tpu.core_type = #tpu.core_type<tc>, window_params = [{transform_indices = @transform_0, window_bounds = array<i64: 1, 4, 256>}, {pipeline_mode = #tpu.pipeline_mode<synchronous>, transform_indices = @transform_1, window_bounds = array<i64: 256, 1024>}, {pipeline_mode = #tpu.pipeline_mode<synchronous>, transform_indices = @transform_2, window_bounds = array<i64: 8, 36>}, {pipeline_mode = #tpu.pipeline_mode<synchronous>, transform_indices = @transform_3, window_bounds = array<i64: 9, 1024>}, {pipeline_mode = #tpu.pipeline_mode<synchronous>, transform_indices = @transform_4, window_bounds = array<i64: 8, 1>}, {pipeline_mode = #tpu.pipeline_mode<synchronous>, transform_indices = @transform_5, window_bounds = array<i64: 8, 1>}, {transform_indices = @transform_6, window_bounds = array<i64: 1>}, {transform_indices = @transform_7, window_bounds = array<i64: 1, 8, 1024>}]} {
    %c0 = arith.constant 0 : index
    %c0_0 = arith.constant 0 : index
    %c0_1 = arith.constant 0 : index
    %0 = vector.load %arg1[%c0, %c0_0, %c0_1] : memref<1x4x256xf32, #tpu.memory_space<vmem>>, vector<1x4x256xf32>
    %1 = vector.shape_cast %0 : vector<1x4x256xf32> to vector<4x256xf32>
    %c0_2 = arith.constant 0 : index
    %c0_3 = arith.constant 0 : index
    %2 = vector.load %arg2[%c0_2, %c0_3] : memref<256x1024xf32, #tpu.memory_space<vmem>>, vector<256x1024xf32>
    %cst = arith.constant dense<0.000000e+00> : vector<4x1024xf32>
    %3 = tpu.matmul %1, %2, %cst {dimension_numbers = #tpu.dot_dimension_numbers<[1], [0], [0], [1], [0, 0, 1, 1], [], []>} : vector<4x256xf32>, vector<256x1024xf32>, vector<4x1024xf32> -> vector<4x1024xf32>
    %c0_4 = arith.constant 0 : index
    %c0_5 = arith.constant 0 : index
    %4 = vector.load %arg4[%c0_4, %c0_5] : memref<9x1024xf32, #tpu.memory_space<vmem>>, vector<9x1024xf32>
    %cst_6 = arith.constant 0.000000e+00 : f32
    %5 = vector.broadcast %cst_6 : f32 to vector<4x33xf32>
    %c0_7 = arith.constant 0 : index
    %c0_8 = arith.constant 0 : index
    %6 = vector.load %arg9[%c0_7, %c0_8] : memref<36x1024xf32, #tpu.memory_space<vmem>>, vector<4x33xf32>
    tpu.vector_store %arg9[%c0_7, %c0_8], %5 {strides = array<i32>} : memref<36x1024xf32, #tpu.memory_space<vmem>>, vector<4x33xf32>,
    %7 = vector.extract_strided_slice %3 {offsets = [0, 0], sizes = [4, 991], strides = [1, 1]} : vector<4x1024xf32> to vector<4x991xf32>
    %8 = vector.extract_strided_slice %4 {offsets = [0, 33], sizes = [1, 991], strides = [1, 1]} : vector<9x1024xf32> to vector<1x991xf32>
    %9 = vector.broadcast %8 : vector<1x991xf32> to vector<4x991xf32>
    %10 = arith.mulf %7, %9 : vector<4x991xf32>
    %c0_9 = arith.constant 0 : index
    %c33 = arith.constant 33 : index
    %11 = vector.load %arg9[%c0_9, %c33] : memref<36x1024xf32, #tpu.memory_space<vmem>>, vector<4x991xf32>
    tpu.vector_store %arg9[%c0_9, %c33], %10 {strides = array<i32>} : memref<36x1024xf32, #tpu.memory_space<vmem>>, vector<4x991xf32>,
    %cst_10 = arith.constant 0.000000e+00 : f32
    %12 = vector.broadcast %cst_10 : f32 to vector<4x32xf32>
    %c4 = arith.constant 4 : index
    %c0_11 = arith.constant 0 : index
    %13 = vector.load %arg9[%c4, %c0_11] : memref<36x1024xf32, #tpu.memory_space<vmem>>, vector<4x32xf32>
    tpu.vector_store %arg9[%c4, %c0_11], %12 {strides = array<i32>} : memref<36x1024xf32, #tpu.memory_space<vmem>>, vector<4x32xf32>,
    %14 = vector.extract_strided_slice %3 {offsets = [0, 0], sizes = [4, 992], strides = [1, 1]} : vector<4x1024xf32> to vector<4x992xf32>
    %15 = vector.extract_strided_slice %4 {offsets = [1, 32], sizes = [1, 992], strides = [1, 1]} : vector<9x1024xf32> to vector<1x992xf32>
    %16 = vector.broadcast %15 : vector<1x992xf32> to vector<4x992xf32>
    %17 = arith.mulf %14, %16 : vector<4x992xf32>
    %c4_12 = arith.constant 4 : index
    %c32 = arith.constant 32 : index
    %18 = vector.load %arg9[%c4_12, %c32] : memref<36x1024xf32, #tpu.memory_space<vmem>>, vector<4x992xf32>
    tpu.vector_store %arg9[%c4_12, %c32], %17 {strides = array<i32>} : memref<36x1024xf32, #tpu.memory_space<vmem>>, vector<4x992xf32>,
    %cst_13 = arith.constant 0.000000e+00 : f32
    %19 = vector.broadcast %cst_13 : f32 to vector<4x31xf32>
    %c8 = arith.constant 8 : index
    %c0_14 = arith.constant 0 : index
    %20 = vector.load %arg9[%c8, %c0_14] : memref<36x1024xf32, #tpu.memory_space<vmem>>, vector<4x31xf32>
    tpu.vector_store %arg9[%c8, %c0_14], %19 {strides = array<i32>} : memref<36x1024xf32, #tpu.memory_space<vmem>>, vector<4x31xf32>,
    %21 = vector.extract_strided_slice %3 {offsets = [0, 0], sizes = [4, 993], strides = [1, 1]} : vector<4x1024xf32> to vector<4x993xf32>
    %22 = vector.extract_strided_slice %4 {offsets = [2, 31], sizes = [1, 993], strides = [1, 1]} : vector<9x1024xf32> to vector<1x993xf32>
    %23 = vector.broadcast %22 : vector<1x993xf32> to vector<4x993xf32>
    %24 = arith.mulf %21, %23 : vector<4x993xf32>
    %c8_15 = arith.constant 8 : index
    %c31 = arith.constant 31 : index
    %25 = vector.load %arg9[%c8_15, %c31] : memref<36x1024xf32, #tpu.memory_space<vmem>>, vector<4x993xf32>
    tpu.vector_store %arg9[%c8_15, %c31], %24 {strides = array<i32>} : memref<36x1024xf32, #tpu.memory_space<vmem>>, vector<4x993xf32>,
    %cst_16 = arith.constant 0.000000e+00 : f32
    %26 = vector.broadcast %cst_16 : f32 to vector<4x1xf32>
    %c12 = arith.constant 12 : index
    %c0_17 = arith.constant 0 : index
    %27 = vector.load %arg9[%c12, %c0_17] : memref<36x1024xf32, #tpu.memory_space<vmem>>, vector<4x1xf32>
    tpu.vector_store %arg9[%c12, %c0_17], %26 {strides = array<i32>} : memref<36x1024xf32, #tpu.memory_space<vmem>>, vector<4x1xf32>,
    %28 = vector.extract_strided_slice %3 {offsets = [0, 0], sizes = [4, 1023], strides = [1, 1]} : vector<4x1024xf32> to vector<4x1023xf32>
    %29 = vector.extract_strided_slice %4 {offsets = [3, 1], sizes = [1, 1023], strides = [1, 1]} : vector<9x1024xf32> to vector<1x1023xf32>
    %30 = vector.broadcast %29 : vector<1x1023xf32> to vector<4x1023xf32>
    %31 = arith.mulf %28, %30 : vector<4x1023xf32>
    %c12_18 = arith.constant 12 : index
    %c1 = arith.constant 1 : index
    %32 = vector.load %arg9[%c12_18, %c1] : memref<36x1024xf32, #tpu.memory_space<vmem>>, vector<4x1023xf32>
    tpu.vector_store %arg9[%c12_18, %c1], %31 {strides = array<i32>} : memref<36x1024xf32, #tpu.memory_space<vmem>>, vector<4x1023xf32>,
    %33 = vector.extract_strided_slice %4 {offsets = [4, 0], sizes = [1, 1024], strides = [1, 1]} : vector<9x1024xf32> to vector<1x1024xf32>
    %34 = vector.broadcast %33 : vector<1x1024xf32> to vector<4x1024xf32>
    %35 = arith.mulf %3, %34 : vector<4x1024xf32>
    %c16 = arith.constant 16 : index
    %c0_19 = arith.constant 0 : index
    %36 = vector.load %arg9[%c16, %c0_19] : memref<36x1024xf32, #tpu.memory_space<vmem>>, vector<4x1024xf32>
    tpu.vector_store %arg9[%c16, %c0_19], %35 {strides = array<i32>} : memref<36x1024xf32, #tpu.memory_space<vmem>>, vector<4x1024xf32>,
    %cst_20 = arith.constant 0.000000e+00 : f32
    %37 = vector.broadcast %cst_20 : f32 to vector<4x1xf32>
    %c20 = arith.constant 20 : index
    %c1023 = arith.constant 1023 : index
    %38 = vector.load %arg9[%c20, %c1023] : memref<36x1024xf32, #tpu.memory_space<vmem>>, vector<4x1xf32>
    tpu.vector_store %arg9[%c20, %c1023], %37 {strides = array<i32>} : memref<36x1024xf32, #tpu.memory_space<vmem>>, vector<4x1xf32>,
    %39 = vector.extract_strided_slice %3 {offsets = [0, 1], sizes = [4, 1023], strides = [1, 1]} : vector<4x1024xf32> to vector<4x1023xf32>
    %40 = vector.extract_strided_slice %4 {offsets = [5, 0], sizes = [1, 1023], strides = [1, 1]} : vector<9x1024xf32> to vector<1x1023xf32>
    %41 = vector.broadcast %40 : vector<1x1023xf32> to vector<4x1023xf32>
    %42 = arith.mulf %39, %41 : vector<4x1023xf32>
    %c20_21 = arith.constant 20 : index
    %c0_22 = arith.constant 0 : index
    %43 = vector.load %arg9[%c20_21, %c0_22] : memref<36x1024xf32, #tpu.memory_space<vmem>>, vector<4x1023xf32>
    tpu.vector_store %arg9[%c20_21, %c0_22], %42 {strides = array<i32>} : memref<36x1024xf32, #tpu.memory_space<vmem>>, vector<4x1023xf32>,
    %cst_23 = arith.constant 0.000000e+00 : f32
    %44 = vector.broadcast %cst_23 : f32 to vector<4x31xf32>
    %c24 = arith.constant 24 : index
    %c993 = arith.constant 993 : index
    %45 = vector.load %arg9[%c24, %c993] : memref<36x1024xf32, #tpu.memory_space<vmem>>, vector<4x31xf32>
    tpu.vector_store %arg9[%c24, %c993], %44 {strides = array<i32>} : memref<36x1024xf32, #tpu.memory_space<vmem>>, vector<4x31xf32>,
    %46 = vector.extract_strided_slice %3 {offsets = [0, 31], sizes = [4, 993], strides = [1, 1]} : vector<4x1024xf32> to vector<4x993xf32>
    %47 = vector.extract_strided_slice %4 {offsets = [6, 0], sizes = [1, 993], strides = [1, 1]} : vector<9x1024xf32> to vector<1x993xf32>
    %48 = vector.broadcast %47 : vector<1x993xf32> to vector<4x993xf32>
    %49 = arith.mulf %46, %48 : vector<4x993xf32>
    %c24_24 = arith.constant 24 : index
    %c0_25 = arith.constant 0 : index
    %50 = vector.load %arg9[%c24_24, %c0_25] : memref<36x1024xf32, #tpu.memory_space<vmem>>, vector<4x993xf32>
    tpu.vector_store %arg9[%c24_24, %c0_25], %49 {strides = array<i32>} : memref<36x1024xf32, #tpu.memory_space<vmem>>, vector<4x993xf32>,
    %cst_26 = arith.constant 0.000000e+00 : f32
    %51 = vector.broadcast %cst_26 : f32 to vector<4x32xf32>
    %c28 = arith.constant 28 : index
    %c992 = arith.constant 992 : index
    %52 = vector.load %arg9[%c28, %c992] : memref<36x1024xf32, #tpu.memory_space<vmem>>, vector<4x32xf32>
    tpu.vector_store %arg9[%c28, %c992], %51 {strides = array<i32>} : memref<36x1024xf32, #tpu.memory_space<vmem>>, vector<4x32xf32>,
    %53 = vector.extract_strided_slice %3 {offsets = [0, 32], sizes = [4, 992], strides = [1, 1]} : vector<4x1024xf32> to vector<4x992xf32>
    %54 = vector.extract_strided_slice %4 {offsets = [7, 0], sizes = [1, 992], strides = [1, 1]} : vector<9x1024xf32> to vector<1x992xf32>
    %55 = vector.broadcast %54 : vector<1x992xf32> to vector<4x992xf32>
    %56 = arith.mulf %53, %55 : vector<4x992xf32>
    %c28_27 = arith.constant 28 : index
    %c0_28 = arith.constant 0 : index
    %57 = vector.load %arg9[%c28_27, %c0_28] : memref<36x1024xf32, #tpu.memory_space<vmem>>, vector<4x992xf32>
    tpu.vector_store %arg9[%c28_27, %c0_28], %56 {strides = array<i32>} : memref<36x1024xf32, #tpu.memory_space<vmem>>, vector<4x992xf32>,
    %cst_29 = arith.constant 0.000000e+00 : f32
    %58 = vector.broadcast %cst_29 : f32 to vector<4x33xf32>
    %c32_30 = arith.constant 32 : index
    %c991 = arith.constant 991 : index
    %59 = vector.load %arg9[%c32_30, %c991] : memref<36x1024xf32, #tpu.memory_space<vmem>>, vector<4x33xf32>
    tpu.vector_store %arg9[%c32_30, %c991], %58 {strides = array<i32>} : memref<36x1024xf32, #tpu.memory_space<vmem>>, vector<4x33xf32>,
    %60 = vector.extract_strided_slice %3 {offsets = [0, 33], sizes = [4, 991], strides = [1, 1]} : vector<4x1024xf32> to vector<4x991xf32>
    %61 = vector.extract_strided_slice %4 {offsets = [8, 0], sizes = [1, 991], strides = [1, 1]} : vector<9x1024xf32> to vector<1x991xf32>
    %62 = vector.broadcast %61 : vector<1x991xf32> to vector<4x991xf32>
    %63 = arith.mulf %60, %62 : vector<4x991xf32>
    %c32_31 = arith.constant 32 : index
    %c0_32 = arith.constant 0 : index
    %64 = vector.load %arg9[%c32_31, %c0_32] : memref<36x1024xf32, #tpu.memory_space<vmem>>, vector<4x991xf32>
    tpu.vector_store %arg9[%c32_31, %c0_32], %63 {strides = array<i32>} : memref<36x1024xf32, #tpu.memory_space<vmem>>, vector<4x991xf32>,
    %c0_33 = arith.constant 0 : index
    %c0_34 = arith.constant 0 : index
    %65 = vector.load %arg3[%c0_33, %c0_34] : memref<8x36xf32, #tpu.memory_space<vmem>>, vector<8x36xf32>
    %c0_35 = arith.constant 0 : index
    %c0_36 = arith.constant 0 : index
    %66 = vector.load %arg9[%c0_35, %c0_36] : memref<36x1024xf32, #tpu.memory_space<vmem>>, vector<36x1024xf32>
    %cst_37 = arith.constant dense<0.000000e+00> : vector<8x1024xf32>
    %67 = tpu.matmul %65, %66, %cst_37 {dimension_numbers = #tpu.dot_dimension_numbers<[1], [0], [0], [1], [0, 0, 1, 1], [], []>} : vector<8x36xf32>, vector<36x1024xf32>, vector<8x1024xf32> -> vector<8x1024xf32>
    %c0_38 = arith.constant 0 : index
    %c0_39 = arith.constant 0 : index
    %68 = vector.load %arg5[%c0_38, %c0_39] : memref<8x1xf32, #tpu.memory_space<vmem>>, vector<8x1xf32>
    %69 = vector.broadcast %68 : vector<8x1xf32> to vector<8x1024xf32>
    %70 = arith.mulf %67, %69 : vector<8x1024xf32>
    %c0_40 = arith.constant 0 : index
    %c0_41 = arith.constant 0 : index
    %71 = vector.load %arg6[%c0_40, %c0_41] : memref<8x1xf32, #tpu.memory_space<vmem>>, vector<8x1xf32>
    %72 = vector.broadcast %71 : vector<8x1xf32> to vector<8x1024xf32>
    %73 = arith.addf %70, %72 : vector<8x1024xf32>
    %c0_42 = arith.constant 0 : index
    %74 = memref.load %arg7[%c0_42] : memref<1xf32, #tpu.memory_space<smem>>
    %cst_43 = arith.constant 0.000000e+00 : f32
    %75 = vector.broadcast %cst_43 : f32 to vector<8x1024xf32>
    %76 = arith.cmpf ogt, %73, %75 : vector<8x1024xf32>
    %77 = vector.broadcast %74 : f32 to vector<8x1024xf32>
    %78 = arith.mulf %77, %73 : vector<8x1024xf32>
    %79 = arith.select %76, %73, %78 : vector<8x1024xi1>, vector<8x1024xf32>
    %c0_44 = arith.constant 0 : index
    %c0_45 = arith.constant 0 : index
    %c0_46 = arith.constant 0 : index
    %80 = vector.load %arg8[%c0_44, %c0_45, %c0_46] : memref<1x8x1024xf32, #tpu.memory_space<vmem>>, vector<1x8x1024xf32>
    %81 = vector.shape_cast %80 : vector<1x8x1024xf32> to vector<8x1024xf32>
    %82 = vector.shape_cast %79 : vector<8x1024xf32> to vector<1x8x1024xf32>
    tpu.vector_store %arg8[%c0_44, %c0_45, %c0_46], %82 {strides = array<i32>} : memref<1x8x1024xf32, #tpu.memory_space<vmem>>, vector<1x8x1024xf32>,
    return
  }
  func.func @transform_0(%arg0: i32) -> (i32, i32, i32) {
    %c0_i32 = arith.constant 0 : i32
    %c0_i32_0 = arith.constant 0 : i32
    %c0_i32_1 = arith.constant 0 : i32
    return %arg0, %c0_i32, %c0_i32_0 : i32, i32, i32
  }
  func.func @transform_1(%arg0: i32) -> (i32, i32) {
    %c0_i32 = arith.constant 0 : i32
    %c0_i32_0 = arith.constant 0 : i32
    %c0_i32_1 = arith.constant 0 : i32
    return %c0_i32, %c0_i32_0 : i32, i32
  }
  func.func @transform_2(%arg0: i32) -> (i32, i32) {
    %c0_i32 = arith.constant 0 : i32
    %c0_i32_0 = arith.constant 0 : i32
    %c0_i32_1 = arith.constant 0 : i32
    return %c0_i32, %c0_i32_0 : i32, i32
  }
  func.func @transform_3(%arg0: i32) -> (i32, i32) {
    %c0_i32 = arith.constant 0 : i32
    %c0_i32_0 = arith.constant 0 : i32
    %c0_i32_1 = arith.constant 0 : i32
    return %c0_i32, %c0_i32_0 : i32, i32
  }
  func.func @transform_4(%arg0: i32) -> (i32, i32) {
    %c0_i32 = arith.constant 0 : i32
    %c0_i32_0 = arith.constant 0 : i32
    %c0_i32_1 = arith.constant 0 : i32
    return %c0_i32, %c0_i32_0 : i32, i32
  }
  func.func @transform_5(%arg0: i32) -> (i32, i32) {
    %c0_i32 = arith.constant 0 : i32
    %c0_i32_0 = arith.constant 0 : i32
    %c0_i32_1 = arith.constant 0 : i32
    return %c0_i32, %c0_i32_0 : i32, i32
  }
  func.func @transform_6(%arg0: i32) -> i32 {
    %c0_i32 = arith.constant 0 : i32
    %c0_i32_0 = arith.constant 0 : i32
    return %c0_i32 : i32
  }
  func.func @transform_7(%arg0: i32) -> (i32, i32, i32) {
    %c0_i32 = arith.constant 0 : i32
    %c0_i32_0 = arith.constant 0 : i32
    %c0_i32_1 = arith.constant 0 : i32
    return %arg0, %c0_i32, %c0_i32_0 : i32, i32, i32
  }
}

</mosaic_0001>

<llo_original>
// kernel: tpu_custom_call.1
$region0: #{tpu_custom_call.1}
  #allocation0 [shape = 'u32[]', space=smem, size = 0x4, offset = 0x4, fixed_abs, tag = 'smem constant byte address 0x4 - core index']
  #allocation1 [shape = 'u32[144,128]{1,0:T(1,128)}', space=vmem, size = 0x12000, scoped, tag = 'internal scratch']
  #allocation2 [shape = 'f32[36,1024]{1,0:T(8,128)}', space=vmem, size = 0x28000, scoped, tag = 'scratch operand']
  #allocation3 [shape = 'f32[1]{0:T(128)S(6)}', space=smem, size = 0x200, scoped, tag = 'scoped memory for tpu_custom_call.1']
  %s0 = inlined_call_operand.vmem [shape: f32[2,4,256], index: 0, kind: input, shape index: {}]
  %s1 = inlined_call_operand.hbm [shape: f32[256,1024], index: 1, kind: input, shape index: {}]
  %s2 = inlined_call_operand.vmem [shape: f32[8,36], index: 2, kind: input, shape index: {}]
  %s3 = inlined_call_operand.hbm [shape: f32[9,1024], index: 3, kind: input, shape index: {}]
  %s4 = inlined_call_operand.vmem [shape: f32[8,1], index: 4, kind: input, shape index: {}]
  %s5 = inlined_call_operand.vmem [shape: f32[8,1], index: 5, kind: input, shape index: {}]
  %s6 = inlined_call_operand.<no memory space> [shape: f32[1], index: 6, kind: input, shape index: {}]
  %s7 = inlined_call_operand.hbm [shape: f32[2,8,1024], index: 7, kind: output, shape index: {}]
  %s8 = sld [smem:[#allocation0]]
  $region69: #{tpu_custom_call.1} parent=0
    _
  %s10 = ssub.s32 1, %s8
  %s11 = scalar_select 0, %s10, %s8
  %12 = sst [smem:[#allocation3]] %s6
  $region1: #{tpu_custom_call.1} parent=0
    #allocation4 [shape = 'u8[1048576]{0}', space=vmem, size = 0x100000, scoped, tag = 'input window, operand 1, single buffered']
    #allocation5 [shape = 's32[2]{0}', space=sflag, size = 0x8, scoped, tag = 'scoped memory for tpu_custom_call.1']
    #allocation6 [shape = 's32[2]{0}', space=sflag, size = 0x8, scoped, tag = 'scoped memory for tpu_custom_call.1']
    #allocation7 [shape = 'u8[65536]{0}', space=vmem, size = 0x10000, scoped, tag = 'input window, operand 3, single buffered']
    #allocation8 [shape = 's32[1]{0}', space=sflag, size = 0x4, scoped, tag = 'scoped memory for tpu_custom_call.1']
    #allocation9 [shape = 'u8[65536]{0}', space=vmem, size = 0x10000, scoped, tag = 'output window, operand 0']
    %13 = vsyncpa [#allocation5], 0
    %14 = vsyncpa [#allocation8], 0
    %15 = vsyncpa [#allocation6], 0
    %s16 = scalar_lea.sflag [#allocation6], 1
    %17 = vsyncpa %s16, 0
    loop: start=0, step=1, limit=4
    $region2: #{tpu_custom_call.1} parent=1 // loop_pre_header
      _
    $region3: #{tpu_custom_call.1} parent=1 // loop_header
      %s19 = sphi 0, %s23
      %p20 = scmp.ge.s32.totalorder %s19, 4
      %s29 = sphi 0, %s31
      %s32 = sphi 0, %s29
      %s33 = sphi 0, %s32
      %s49 = sphi 0, %s33
      %s53 = sphi 0, %s53
      %s55 = sphi 0, %s53
      %s56 = sphi 0, %s55
      %s70 = sphi 0, %s56
      %s74 = sphi 0, %s74
      %s76 = sphi 0, %s74
      %s77 = sphi 0, %s76
      %s91 = sphi 0, %s77
      %s95 = sphi 0, %s95
      %s97 = sphi 0, %s95
      %s98 = sphi 0, %s97
      %s112 = sphi 0, %s98
      %s116 = sphi 0, %s116
      %s118 = sphi 0, %s116
      %s119 = sphi 0, %s118
      %s133 = sphi 0, %s119
      %s137 = sphi 0, %s137
      %s139 = sphi 0, %s137
      %s140 = sphi 0, %s139
      %s154 = sphi 0, %s140
      %s158 = sphi 0, %s158
      %s160 = sphi 0, %s158
      %s161 = sphi 0, %s160
      %s175 = sphi 0, %s161
      %s181 = sphi 0, %s183
      %s184 = sphi 0, %s181
      %s185 = sphi 0, %s184
      %s201 = sphi 0, %s185
    $region4: #{tpu_custom_call.1} parent=1 // loop_header_branch
      %22 = sbr.rel (%p20) target = $region8
    $region5: #{tpu_custom_call.1} parent=1 // loop_body
      %s24 = ssub.s32 %s19, 1
      %s25 = ssub.s32 %s19, 2
      %s26 = sadd.s32 %s19, 1
      %s27 = ssub.s32 %s19, %s26
      %p28 = scmp.eq.s32.totalorder %s27, 0
      %s30 = sadd.s32 %s29, 1
      %s31 = scalar_select %p28, %s29, %s30
      %p34 = pneg %p28
      %p35 = scmp.eq.s32.totalorder %s19, 1
      %p36 = por %p34, %p35
      %p37 = scmp.ne.s32.totalorder %s29, %s32
      %p38 = scmp.eq.s32.totalorder %s19, 0
      %p39 = por %p37, %p38
      %p40 = scmp.ne.s32.totalorder %s29, %s32
      %p41 = scmp.eq.s32.totalorder %s24, 1
      %p42 = por %p40, %p41
      %p43 = scmp.ne.s32.totalorder %s32, %s33
      %p44 = scmp.eq.s32.totalorder %s24, 0
      %p45 = por %p43, %p44
      %p46 = scmp.ne.s32.totalorder %s32, %s33
      %p47 = scmp.eq.s32.totalorder %s25, 1
      %p48 = por %p46, %p47
      %p50 = scmp.ne.s32.totalorder %s33, %s49
      %p51 = scmp.eq.s32.totalorder %s25, 0
      %p52 = por %p50, %p51
      %s54 = sadd.s32 %s53, 1
      %p57 = scmp.eq.s32.totalorder %s19, 1
      %p58 = scmp.ne.s32.totalorder %s53, %s55
      %p59 = scmp.eq.s32.totalorder %s19, 0
      %p60 = por %p58, %p59
      %p61 = scmp.ne.s32.totalorder %s53, %s55
      %p62 = scmp.eq.s32.totalorder %s24, 1
      %p63 = por %p61, %p62
      %p64 = scmp.ne.s32.totalorder %s55, %s56
      %p65 = scmp.eq.s32.totalorder %s24, 0
      %p66 = por %p64, %p65
      %p67 = scmp.ne.s32.totalorder %s55, %s56
      %p68 = scmp.eq.s32.totalorder %s25, 1
      %p69 = por %p67, %p68
      %p71 = scmp.ne.s32.totalorder %s56, %s70
      %p72 = scmp.eq.s32.totalorder %s25, 0
      %p73 = por %p71, %p72
      %s75 = sadd.s32 %s74, 1
      %p78 = scmp.eq.s32.totalorder %s19, 1
      %p79 = scmp.ne.s32.totalorder %s74, %s76
      %p80 = scmp.eq.s32.totalorder %s19, 0
      %p81 = por %p79, %p80
      %p82 = scmp.ne.s32.totalorder %s74, %s76
      %p83 = scmp.eq.s32.totalorder %s24, 1
      %p84 = por %p82, %p83
      %p85 = scmp.ne.s32.totalorder %s76, %s77
      %p86 = scmp.eq.s32.totalorder %s24, 0
      %p87 = por %p85, %p86
      %p88 = scmp.ne.s32.totalorder %s76, %s77
      %p89 = scmp.eq.s32.totalorder %s25, 1
      %p90 = por %p88, %p89
      %p92 = scmp.ne.s32.totalorder %s77, %s91
      %p93 = scmp.eq.s32.totalorder %s25, 0
      %p94 = por %p92, %p93
      %s96 = sadd.s32 %s95, 1
      %p99 = scmp.eq.s32.totalorder %s19, 1
      %p100 = scmp.ne.s32.totalorder %s95, %s97
      %p101 = scmp.eq.s32.totalorder %s19, 0
      %p102 = por %p100, %p101
      %p103 = scmp.ne.s32.totalorder %s95, %s97
      %p104 = scmp.eq.s32.totalorder %s24, 1
      %p105 = por %p103, %p104
      %p106 = scmp.ne.s32.totalorder %s97, %s98
      %p107 = scmp.eq.s32.totalorder %s24, 0
      %p108 = por %p106, %p107
      %p109 = scmp.ne.s32.totalorder %s97, %s98
      %p110 = scmp.eq.s32.totalorder %s25, 1
      %p111 = por %p109, %p110
      %p113 = scmp.ne.s32.totalorder %s98, %s112
      %p114 = scmp.eq.s32.totalorder %s25, 0
      %p115 = por %p113, %p114
      %s117 = sadd.s32 %s116, 1
      %p120 = scmp.eq.s32.totalorder %s19, 1
      %p121 = scmp.ne.s32.totalorder %s116, %s118
      %p122 = scmp.eq.s32.totalorder %s19, 0
      %p123 = por %p121, %p122
      %p124 = scmp.ne.s32.totalorder %s116, %s118
      %p125 = scmp.eq.s32.totalorder %s24, 1
      %p126 = por %p124, %p125
      %p127 = scmp.ne.s32.totalorder %s118, %s119
      %p128 = scmp.eq.s32.totalorder %s24, 0
      %p129 = por %p127, %p128
      %p130 = scmp.ne.s32.totalorder %s118, %s119
      %p131 = scmp.eq.s32.totalorder %s25, 1
      %p132 = por %p130, %p131
      %p134 = scmp.ne.s32.totalorder %s119, %s133
      %p135 = scmp.eq.s32.totalorder %s25, 0
      %p136 = por %p134, %p135
      %s138 = sadd.s32 %s137, 1
      %p141 = scmp.eq.s32.totalorder %s19, 1
      %p142 = scmp.ne.s32.totalorder %s137, %s139
      %p143 = scmp.eq.s32.totalorder %s19, 0
      %p144 = por %p142, %p143
      %p145 = scmp.ne.s32.totalorder %s137, %s139
      %p146 = scmp.eq.s32.totalorder %s24, 1
      %p147 = por %p145, %p146
      %p148 = scmp.ne.s32.totalorder %s139, %s140
      %p149 = scmp.eq.s32.totalorder %s24, 0
      %p150 = por %p148, %p149
      %p151 = scmp.ne.s32.totalorder %s139, %s140
      %p152 = scmp.eq.s32.totalorder %s25, 1
      %p153 = por %p151, %p152
      %p155 = scmp.ne.s32.totalorder %s140, %s154
      %p156 = scmp.eq.s32.totalorder %s25, 0
      %p157 = por %p155, %p156
      %s159 = sadd.s32 %s158, 1
      %p162 = scmp.eq.s32.totalorder %s19, 1
      %p163 = scmp.ne.s32.totalorder %s158, %s160
      %p164 = scmp.eq.s32.totalorder %s19, 0
      %p165 = por %p163, %p164
      %p166 = scmp.ne.s32.totalorder %s158, %s160
      %p167 = scmp.eq.s32.totalorder %s24, 1
      %p168 = por %p166, %p167
      %p169 = scmp.ne.s32.totalorder %s160, %s161
      %p170 = scmp.eq.s32.totalorder %s24, 0
      %p171 = por %p169, %p170
      %p172 = scmp.ne.s32.totalorder %s160, %s161
      %p173 = scmp.eq.s32.totalorder %s25, 1
      %p174 = por %p172, %p173
      %p176 = scmp.ne.s32.totalorder %s161, %s175
      %p177 = scmp.eq.s32.totalorder %s25, 0
      %p178 = por %p176, %p177
      %s179 = ssub.s32 %s19, %s26
      %p180 = scmp.eq.s32.totalorder %s179, 0
      %s182 = sadd.s32 %s181, 1
      %s183 = scalar_select %p180, %s181, %s182
      %p186 = pneg %p180
      %p187 = scmp.eq.s32.totalorder %s19, 1
      %p188 = por %p186, %p187
      %p189 = scmp.ne.s32.totalorder %s181, %s184
      %p190 = scmp.eq.s32.totalorder %s19, 0
      %p191 = por %p189, %p190
      %p192 = scmp.ne.s32.totalorder %s181, %s184
      %p193 = scmp.eq.s32.totalorder %s24, 1
      %p194 = por %p192, %p193
      %p195 = scmp.ne.s32.totalorder %s184, %s185
      %p196 = scmp.eq.s32.totalorder %s24, 0
      %p197 = por %p195, %p196
      %p198 = scmp.ne.s32.totalorder %s184, %s185
      %p199 = scmp.eq.s32.totalorder %s25, 1
      %p200 = por %p198, %p199
      %p202 = scmp.ne.s32.totalorder %s185, %s201
      %p203 = scmp.eq.s32.totalorder %s25, 0
      %p204 = por %p202, %p203
      %p205 = scmp.le.s32.totalorder 1, %s19
      %p206 = scmp.lt.s32.totalorder %s19, 3
      %p207 = pnand %p205, %p206
      %p208 = pneg %p207
      // Predicated region
      $region9: #{tpu_custom_call.1} parent=5 // pred_check
        _
      $region10: #{tpu_custom_call.1} parent=5 // pred_check_branch
        %210 = sbr.rel (%p207) target = $region12
      $region11: #{tpu_custom_call.1} parent=5 // pred_region
        %s211 = ssub.s32 %s19, 1
        // Predicated region
        $region13: #{tpu_custom_call.1} parent=11 // pred_check
          %p212 = pneg %p66
        $region14: #{tpu_custom_call.1} parent=11 // pred_check_branch
          %214 = sbr.rel (%p212) target = $region16
        $region15: #{tpu_custom_call.1} parent=11 // pred_region
          %s216 = ssub.s32 32768, 32768
          %217 = vsyncadd [#allocation5], %s216
          %s218 = sshll.u32 [#allocation4], 4
          %s219 = int_to_ptr.vmem [resolvable:$true] %s218
          %224 = dma.hbm_to_vmem [thread:$0]  %s1, 32768, %s219, [#allocation5], 1024, 1024, 64
        $region16: #{tpu_custom_call.1} parent=11 // pred_fallthru
          _
        // Predicated region
        $region17: #{tpu_custom_call.1} parent=11 // pred_check
          %p225 = pneg %p87
        $region18: #{tpu_custom_call.1} parent=11 // pred_check_branch
          %227 = sbr.rel (%p225) target = $region20
        $region19: #{tpu_custom_call.1} parent=11 // pred_region
          _
        $region20: #{tpu_custom_call.1} parent=11 // pred_fallthru
          _
        // Predicated region
        $region21: #{tpu_custom_call.1} parent=11 // pred_check
          %p228 = pneg %p108
        $region22: #{tpu_custom_call.1} parent=11 // pred_check_branch
          %230 = sbr.rel (%p228) target = $region24
        $region23: #{tpu_custom_call.1} parent=11 // pred_region
          %s232 = ssub.s32 2048, 2048
          %233 = vsyncadd [#allocation8], %s232
          %s234 = sshll.u32 [#allocation7], 4
          %s235 = int_to_ptr.vmem [resolvable:$true] %s234
          %240 = dma.hbm_to_vmem [thread:$0]  %s3, 2048, %s235, [#allocation8], 1024, 1024, 64
        $region24: #{tpu_custom_call.1} parent=11 // pred_fallthru
          _
        // Predicated region
        $region25: #{tpu_custom_call.1} parent=11 // pred_check
          %p241 = pneg %p129
        $region26: #{tpu_custom_call.1} parent=11 // pred_check_branch
          %243 = sbr.rel (%p241) target = $region28
        $region27: #{tpu_custom_call.1} parent=11 // pred_region
          _
        $region28: #{tpu_custom_call.1} parent=11 // pred_fallthru
          _
        // Predicated region
        $region29: #{tpu_custom_call.1} parent=11 // pred_check
          %p244 = pneg %p150
        $region30: #{tpu_custom_call.1} parent=11 // pred_check_branch
          %246 = sbr.rel (%p244) target = $region32
        $region31: #{tpu_custom_call.1} parent=11 // pred_region
          _
        $region32: #{tpu_custom_call.1} parent=11 // pred_fallthru
          _
        // Predicated region
        $region33: #{tpu_custom_call.1} parent=11 // pred_check
          %p247 = pneg %p171
        $region34: #{tpu_custom_call.1} parent=11 // pred_check_branch
          %249 = sbr.rel (%p247) target = $region36
        $region35: #{tpu_custom_call.1} parent=11 // pred_region
          _
        $region36: #{tpu_custom_call.1} parent=11 // pred_fallthru
          _
      $region12: #{tpu_custom_call.1} parent=5 // pred_fallthru
        _
      %p250 = scmp.lt.s32.totalorder %s19, 2
      // Predicated region
      $region37: #{tpu_custom_call.1} parent=5 // pred_check
        %p251 = pneg %p250
      $region38: #{tpu_custom_call.1} parent=5 // pred_check_branch
        %253 = sbr.rel (%p251) target = $region40
      $region39: #{tpu_custom_call.1} parent=5 // pred_region
        // Predicated region
        $region41: #{tpu_custom_call.1} parent=39 // pred_check
          %p254 = pneg %p39
        $region42: #{tpu_custom_call.1} parent=39 // pred_check_branch
          %256 = sbr.rel (%p254) target = $region44
        $region43: #{tpu_custom_call.1} parent=39 // pred_region
          %p257 = scmp.lt.s32.totalorder %s19, 1
          %s258 = scalar_select %p257, %s19, 1
          %s259 = smul.addr %s258, 2
          %s260 = smul.addr %s259, 4
          %s261 = scalar_lea.vmem %s0, %s260
        $region44: #{tpu_custom_call.1} parent=39 // pred_fallthru
          _
      $region40: #{tpu_custom_call.1} parent=5 // pred_fallthru
        _
      %p262 = scmp.le.s32.totalorder 1, %s19
      %p263 = scmp.lt.s32.totalorder %s19, 3
      %p264 = pnand %p262, %p263
      %p265 = pneg %p264
      // Predicated region
      $region45: #{tpu_custom_call.1} parent=5 // pred_check
        _
      $region46: #{tpu_custom_call.1} parent=5 // pred_check_branch
        %267 = sbr.rel (%p264) target = $region48
      $region47: #{tpu_custom_call.1} parent=5 // pred_region
        %s268 = ssub.s32 %s19, 1
        // Predicated region
        $region49: #{tpu_custom_call.1} parent=47 // pred_check
          %p269 = pneg %p66
        $region50: #{tpu_custom_call.1} parent=47 // pred_check_branch
          %271 = sbr.rel (%p269) target = $region52
        $region51: #{tpu_custom_call.1} parent=47 // pred_region
          %272 = dma.done [#allocation5], 32768
        $region52: #{tpu_custom_call.1} parent=47 // pred_fallthru
          _
        // Predicated region
        $region53: #{tpu_custom_call.1} parent=47 // pred_check
          %p273 = pneg %p108
        $region54: #{tpu_custom_call.1} parent=47 // pred_check_branch
          %275 = sbr.rel (%p273) target = $region56
        $region55: #{tpu_custom_call.1} parent=47 // pred_region
          %276 = dma.done [#allocation8], 2048
        $region56: #{tpu_custom_call.1} parent=47 // pred_fallthru
          _
        %p277 = scmp.lt.s32.totalorder %s24, 1
        %s278 = scalar_select %p277, %s24, 1
        %s279 = smul.addr %s278, 2
        %s280 = smul.addr %s279, 4
        %s281 = scalar_lea.vmem %s0, %s280
        %p282 = pneg %p45
        %p283 = pneg %p42
        %p284 = pneg %p66
        %p285 = pneg %p63
        %p286 = pneg %p87
        %p287 = pneg %p84
        %p288 = pneg %p108
        %p289 = pneg %p105
        %p290 = pneg %p129
        %p291 = pneg %p126
        %p292 = pneg %p150
        %p293 = pneg %p147
        %p294 = pneg %p171
        %p295 = pneg %p168
        %p296 = pneg %p197
        %p297 = pneg %p194
        %s298 = sand.u32 %s184, 1
        %s299 = scalar_lea.sflag [#allocation6], %s298
        %s300 = sand.u32 %s184, 1
        %s301 = smul.addr %s300, 64
        %s302 = scalar_lea.vmem [#allocation9], %s301
        %p303 = scmp.lt.s32.totalorder %s24, 1
        %s304 = scalar_select %p303, %s24, 1
        %s305 = smul.addr %s304, 2
        %s306 = smul.addr %s305, 4
        %s307 = scalar_lea.vmem %s0, %s306
        %v308 = vld [vmem:[%s307] sm:$0xff]
        %v309 = vld [vmem:[#allocation4] sm:$0xff]
        %v310 = vld [vmem:[#allocation4 + $0x8] sm:$0xff]
        %v311 = vld [vmem:[#allocation4 + $0x10] sm:$0xff]
        %v312 = vld [vmem:[#allocation4 + $0x18] sm:$0xff]
        %v313 = vld [vmem:[#allocation4 + $0x20] sm:$0xff]
        %v314 = vld [vmem:[#allocation4 + $0x28] sm:$0xff]
        %v315 = vld [vmem:[#allocation4 + $0x30] sm:$0xff]
        %v316 = vld [vmem:[#allocation4 + $0x38] sm:$0xff]
        %v317 = vld [vmem:[#allocation4 + $0x40] sm:$0xff]
        %v318 = vld [vmem:[#allocation4 + $0x48] sm:$0xff]
        %v319 = vld [vmem:[#allocation4 + $0x50] sm:$0xff]
        %v320 = vld [vmem:[#allocation4 + $0x58] sm:$0xff]
        %v321 = vld [vmem:[#allocation4 + $0x60] sm:$0xff]
        %v322 = vld [vmem:[#allocation4 + $0x68] sm:$0xff]
        %v323 = vld [vmem:[#allocation4 + $0x70] sm:$0xff]
        %v324 = vld [vmem:[#allocation4 + $0x78] sm:$0xff]
        %v325 = vld [vmem:[#allocation4 + $0x80] sm:$0xff]
        %v326 = vld [vmem:[#allocation4 + $0x88] sm:$0xff]
        %v327 = vld [vmem:[#allocation4 + $0x90] sm:$0xff]
        %v328 = vld [vmem:[#allocation4 + $0x98] sm:$0xff]
        %v329 = vld [vmem:[#allocation4 + $0xa0] sm:$0xff]
        %v330 = vld [vmem:[#allocation4 + $0xa8] sm:$0xff]
        %v331 = vld [vmem:[#allocation4 + $0xb0] sm:$0xff]
        %v332 = vld [vmem:[#allocation4 + $0xb8] sm:$0xff]
        %v333 = vld [vmem:[#allocation4 + $0xc0] sm:$0xff]
        %v334 = vld [vmem:[#allocation4 + $0xc8] sm:$0xff]
        %v335 = vld [vmem:[#allocation4 + $0xd0] sm:$0xff]
        %v336 = vld [vmem:[#allocation4 + $0xd8] sm:$0xff]
        %v337 = vld [vmem:[#allocation4 + $0xe0] sm:$0xff]
        %v338 = vld [vmem:[#allocation4 + $0xe8] sm:$0xff]
        %v339 = vld [vmem:[#allocation4 + $0xf0] sm:$0xff]
        %v340 = vld [vmem:[#allocation4 + $0xf8] sm:$0xff]
        %v341 = vld [vmem:[#allocation4 + $0x100] sm:$0xff]
        %v342 = vld [vmem:[#allocation4 + $0x108] sm:$0xff]
        %v343 = vld [vmem:[#allocation4 + $0x110] sm:$0xff]
        %v344 = vld [vmem:[#allocation4 + $0x118] sm:$0xff]
        %v345 = vld [vmem:[#allocation4 + $0x120] sm:$0xff]
        %v346 = vld [vmem:[#allocation4 + $0x128] sm:$0xff]
        %v347 = vld [vmem:[#allocation4 + $0x130] sm:$0xff]
        %v348 = vld [vmem:[#allocation4 + $0x138] sm:$0xff]
        %v349 = vld [vmem:[#allocation4 + $0x140] sm:$0xff]
        %v350 = vld [vmem:[#allocation4 + $0x148] sm:$0xff]
        %v351 = vld [vmem:[#allocation4 + $0x150] sm:$0xff]
        %v352 = vld [vmem:[#allocation4 + $0x158] sm:$0xff]
        %v353 = vld [vmem:[#allocation4 + $0x160] sm:$0xff]
        %v354 = vld [vmem:[#allocation4 + $0x168] sm:$0xff]
        %v355 = vld [vmem:[#allocation4 + $0x170] sm:$0xff]
        %v356 = vld [vmem:[#allocation4 + $0x178] sm:$0xff]
        %v357 = vld [vmem:[#allocation4 + $0x180] sm:$0xff]
        %v358 = vld [vmem:[#allocation4 + $0x188] sm:$0xff]
        %v359 = vld [vmem:[#allocation4 + $0x190] sm:$0xff]
        %v360 = vld [vmem:[#allocation4 + $0x198] sm:$0xff]
        %v361 = vld [vmem:[#allocation4 + $0x1a0] sm:$0xff]
        %v362 = vld [vmem:[#allocation4 + $0x1a8] sm:$0xff]
        %v363 = vld [vmem:[#allocation4 + $0x1b0] sm:$0xff]
        %v364 = vld [vmem:[#allocation4 + $0x1b8] sm:$0xff]
        %v365 = vld [vmem:[#allocation4 + $0x1c0] sm:$0xff]
        %v366 = vld [vmem:[#allocation4 + $0x1c8] sm:$0xff]
        %v367 = vld [vmem:[#allocation4 + $0x1d0] sm:$0xff]
        %v368 = vld [vmem:[#allocation4 + $0x1d8] sm:$0xff]
        %v369 = vld [vmem:[#allocation4 + $0x1e0] sm:$0xff]
        %v370 = vld [vmem:[#allocation4 + $0x1e8] sm:$0xff]
        %v371 = vld [vmem:[#allocation4 + $0x1f0] sm:$0xff]
        %v372 = vld [vmem:[#allocation4 + $0x1f8] sm:$0xff]
        %v373 = vld [vmem:[#allocation4 + $0x200] sm:$0xff]
        %v374 = vld [vmem:[#allocation4 + $0x208] sm:$0xff]
        %v375 = vld [vmem:[#allocation4 + $0x210] sm:$0xff]
        %v376 = vld [vmem:[#allocation4 + $0x218] sm:$0xff]
        %v377 = vld [vmem:[#allocation4 + $0x220] sm:$0xff]
        %v378 = vld [vmem:[#allocation4 + $0x228] sm:$0xff]
        %v379 = vld [vmem:[#allocation4 + $0x230] sm:$0xff]
        %v380 = vld [vmem:[#allocation4 + $0x238] sm:$0xff]
        %v381 = vld [vmem:[#allocation4 + $0x240] sm:$0xff]
        %v382 = vld [vmem:[#allocation4 + $0x248] sm:$0xff]
        %v383 = vld [vmem:[#allocation4 + $0x250] sm:$0xff]
        %v384 = vld [vmem:[#allocation4 + $0x258] sm:$0xff]
        %v385 = vld [vmem:[#allocation4 + $0x260] sm:$0xff]
        %v386 = vld [vmem:[#allocation4 + $0x268] sm:$0xff]
        %v387 = vld [vmem:[#allocation4 + $0x270] sm:$0xff]
        %v388 = vld [vmem:[#allocation4 + $0x278] sm:$0xff]
        %v389 = vld [vmem:[#allocation4 + $0x280] sm:$0xff]
        %v390 = vld [vmem:[#allocation4 + $0x288] sm:$0xff]
        %v391 = vld [vmem:[#allocation4 + $0x290] sm:$0xff]
        %v392 = vld [vmem:[#allocation4 + $0x298] sm:$0xff]
        %v393 = vld [vmem:[#allocation4 + $0x2a0] sm:$0xff]
        %v394 = vld [vmem:[#allocation4 + $0x2a8] sm:$0xff]
        %v395 = vld [vmem:[#allocation4 + $0x2b0] sm:$0xff]
        %v396 = vld [vmem:[#allocation4 + $0x2b8] sm:$0xff]
        %v397 = vld [vmem:[#allocation4 + $0x2c0] sm:$0xff]
        %v398 = vld [vmem:[#allocation4 + $0x2c8] sm:$0xff]
        %v399 = vld [vmem:[#allocation4 + $0x2d0] sm:$0xff]
        %v400 = vld [vmem:[#allocation4 + $0x2d8] sm:$0xff]
        %v401 = vld [vmem:[#allocation4 + $0x2e0] sm:$0xff]
        %v402 = vld [vmem:[#allocation4 + $0x2e8] sm:$0xff]
        %v403 = vld [vmem:[#allocation4 + $0x2f0] sm:$0xff]
        %v404 = vld [vmem:[#allocation4 + $0x2f8] sm:$0xff]
        %v405 = vld [vmem:[#allocation4 + $0x300] sm:$0xff]
        %v406 = vld [vmem:[#allocation4 + $0x308] sm:$0xff]
        %v407 = vld [vmem:[#allocation4 + $0x310] sm:$0xff]
        %v408 = vld [vmem:[#allocation4 + $0x318] sm:$0xff]
        %v409 = vld [vmem:[#allocation4 + $0x320] sm:$0xff]
        %v410 = vld [vmem:[#allocation4 + $0x328] sm:$0xff]
        %v411 = vld [vmem:[#allocation4 + $0x330] sm:$0xff]
        %v412 = vld [vmem:[#allocation4 + $0x338] sm:$0xff]
        %v413 = vld [vmem:[#allocation4 + $0x340] sm:$0xff]
        %v414 = vld [vmem:[#allocation4 + $0x348] sm:$0xff]
        %v415 = vld [vmem:[#allocation4 + $0x350] sm:$0xff]
        %v416 = vld [vmem:[#allocation4 + $0x358] sm:$0xff]
        %v417 = vld [vmem:[#allocation4 + $0x360] sm:$0xff]
        %v418 = vld [vmem:[#allocation4 + $0x368] sm:$0xff]
        %v419 = vld [vmem:[#allocation4 + $0x370] sm:$0xff]
        %v420 = vld [vmem:[#allocation4 + $0x378] sm:$0xff]
        %v421 = vld [vmem:[#allocation4 + $0x380] sm:$0xff]
        %v422 = vld [vmem:[#allocation4 + $0x388] sm:$0xff]
        %v423 = vld [vmem:[#allocation4 + $0x390] sm:$0xff]
        %v424 = vld [vmem:[#allocation4 + $0x398] sm:$0xff]
        %v425 = vld [vmem:[#allocation4 + $0x3a0] sm:$0xff]
        %v426 = vld [vmem:[#allocation4 + $0x3a8] sm:$0xff]
        %v427 = vld [vmem:[#allocation4 + $0x3b0] sm:$0xff]
        %v428 = vld [vmem:[#allocation4 + $0x3b8] sm:$0xff]
        %v429 = vld [vmem:[#allocation4 + $0x3c0] sm:$0xff]
        %v430 = vld [vmem:[#allocation4 + $0x3c8] sm:$0xff]
        %v431 = vld [vmem:[#allocation4 + $0x3d0] sm:$0xff]
        %v432 = vld [vmem:[#allocation4 + $0x3d8] sm:$0xff]
        %v433 = vld [vmem:[#allocation4 + $0x3e0] sm:$0xff]
        %v434 = vld [vmem:[#allocation4 + $0x3e8] sm:$0xff]
        %v435 = vld [vmem:[#allocation4 + $0x3f0] sm:$0xff]
        %v436 = vld [vmem:[#allocation4 + $0x3f8] sm:$0xff]
        %v437 = vld [vmem:[#allocation4 + $0x400] sm:$0xff]
        %v438 = vld [vmem:[#allocation4 + $0x408] sm:$0xff]
        %v439 = vld [vmem:[#allocation4 + $0x410] sm:$0xff]
        %v440 = vld [vmem:[#allocation4 + $0x418] sm:$0xff]
        %v441 = vld [vmem:[#allocation4 + $0x420] sm:$0xff]
        %v442 = vld [vmem:[#allocation4 + $0x428] sm:$0xff]
        %v443 = vld [vmem:[#allocation4 + $0x430] sm:$0xff]
        %v444 = vld [vmem:[#allocation4 + $0x438] sm:$0xff]
        %v445 = vld [vmem:[#allocation4 + $0x440] sm:$0xff]
        %v446 = vld [vmem:[#allocation4 + $0x448] sm:$0xff]
        %v447 = vld [vmem:[#allocation4 + $0x450] sm:$0xff]
        %v448 = vld [vmem:[#allocation4 + $0x458] sm:$0xff]
        %v449 = vld [vmem:[#allocation4 + $0x460] sm:$0xff]
        %v450 = vld [vmem:[#allocation4 + $0x468] sm:$0xff]
        %v451 = vld [vmem:[#allocation4 + $0x470] sm:$0xff]
        %v452 = vld [vmem:[#allocation4 + $0x478] sm:$0xff]
        %v453 = vld [vmem:[#allocation4 + $0x480] sm:$0xff]
        %v454 = vld [vmem:[#allocation4 + $0x488] sm:$0xff]
        %v455 = vld [vmem:[#allocation4 + $0x490] sm:$0xff]
        %v456 = vld [vmem:[#allocation4 + $0x498] sm:$0xff]
        %v457 = vld [vmem:[#allocation4 + $0x4a0] sm:$0xff]
        %v458 = vld [vmem:[#allocation4 + $0x4a8] sm:$0xff]
        %v459 = vld [vmem:[#allocation4 + $0x4b0] sm:$0xff]
        %v460 = vld [vmem:[#allocation4 + $0x4b8] sm:$0xff]
        %v461 = vld [vmem:[#allocation4 + $0x4c0] sm:$0xff]
        %v462 = vld [vmem:[#allocation4 + $0x4c8] sm:$0xff]
        %v463 = vld [vmem:[#allocation4 + $0x4d0] sm:$0xff]
        %v464 = vld [vmem:[#allocation4 + $0x4d8] sm:$0xff]
        %v465 = vld [vmem:[#allocation4 + $0x4e0] sm:$0xff]
        %v466 = vld [vmem:[#allocation4 + $0x4e8] sm:$0xff]
        %v467 = vld [vmem:[#allocation4 + $0x4f0] sm:$0xff]
        %v468 = vld [vmem:[#allocation4 + $0x4f8] sm:$0xff]
        %v469 = vld [vmem:[#allocation4 + $0x500] sm:$0xff]
        %v470 = vld [vmem:[#allocation4 + $0x508] sm:$0xff]
        %v471 = vld [vmem:[#allocation4 + $0x510] sm:$0xff]
        %v472 = vld [vmem:[#allocation4 + $0x518] sm:$0xff]
        %v473 = vld [vmem:[#allocation4 + $0x520] sm:$0xff]
        %v474 = vld [vmem:[#allocation4 + $0x528] sm:$0xff]
        %v475 = vld [vmem:[#allocation4 + $0x530] sm:$0xff]
        %v476 = vld [vmem:[#allocation4 + $0x538] sm:$0xff]
        %v477 = vld [vmem:[#allocation4 + $0x540] sm:$0xff]
        %v478 = vld [vmem:[#allocation4 + $0x548] sm:$0xff]
        %v479 = vld [vmem:[#allocation4 + $0x550] sm:$0xff]
        %v480 = vld [vmem:[#allocation4 + $0x558] sm:$0xff]
        %v481 = vld [vmem:[#allocation4 + $0x560] sm:$0xff]
        %v482 = vld [vmem:[#allocation4 + $0x568] sm:$0xff]
        %v483 = vld [vmem:[#allocation4 + $0x570] sm:$0xff]
        %v484 = vld [vmem:[#allocation4 + $0x578] sm:$0xff]
        %v485 = vld [vmem:[#allocation4 + $0x580] sm:$0xff]
        %v486 = vld [vmem:[#allocation4 + $0x588] sm:$0xff]
        %v487 = vld [vmem:[#allocation4 + $0x590] sm:$0xff]
        %v488 = vld [vmem:[#allocation4 + $0x598] sm:$0xff]
        %v489 = vld [vmem:[#allocation4 + $0x5a0] sm:$0xff]
        %v490 = vld [vmem:[#allocation4 + $0x5a8] sm:$0xff]
        %v491 = vld [vmem:[#allocation4 + $0x5b0] sm:$0xff]
        %v492 = vld [vmem:[#allocation4 + $0x5b8] sm:$0xff]
        %v493 = vld [vmem:[#allocation4 + $0x5c0] sm:$0xff]
        %v494 = vld [vmem:[#allocation4 + $0x5c8] sm:$0xff]
        %v495 = vld [vmem:[#allocation4 + $0x5d0] sm:$0xff]
        %v496 = vld [vmem:[#allocation4 + $0x5d8] sm:$0xff]
        %v497 = vld [vmem:[#allocation4 + $0x5e0] sm:$0xff]
        %v498 = vld [vmem:[#allocation4 + $0x5e8] sm:$0xff]
        %v499 = vld [vmem:[#allocation4 + $0x5f0] sm:$0xff]
        %v500 = vld [vmem:[#allocation4 + $0x5f8] sm:$0xff]
        %v501 = vld [vmem:[#allocation4 + $0x600] sm:$0xff]
        %v502 = vld [vmem:[#allocation4 + $0x608] sm:$0xff]
        %v503 = vld [vmem:[#allocation4 + $0x610] sm:$0xff]
        %v504 = vld [vmem:[#allocation4 + $0x618] sm:$0xff]
        %v505 = vld [vmem:[#allocation4 + $0x620] sm:$0xff]
        %v506 = vld [vmem:[#allocation4 + $0x628] sm:$0xff]
        %v507 = vld [vmem:[#allocation4 + $0x630] sm:$0xff]
        %v508 = vld [vmem:[#allocation4 + $0x638] sm:$0xff]
        %v509 = vld [vmem:[#allocation4 + $0x640] sm:$0xff]
        %v510 = vld [vmem:[#allocation4 + $0x648] sm:$0xff]
        %v511 = vld [vmem:[#allocation4 + $0x650] sm:$0xff]
        %v512 = vld [vmem:[#allocation4 + $0x658] sm:$0xff]
        %v513 = vld [vmem:[#allocation4 + $0x660] sm:$0xff]
        %v514 = vld [vmem:[#allocation4 + $0x668] sm:$0xff]
        %v515 = vld [vmem:[#allocation4 + $0x670] sm:$0xff]
        %v516 = vld [vmem:[#allocation4 + $0x678] sm:$0xff]
        %v517 = vld [vmem:[#allocation4 + $0x680] sm:$0xff]
        %v518 = vld [vmem:[#allocation4 + $0x688] sm:$0xff]
        %v519 = vld [vmem:[#allocation4 + $0x690] sm:$0xff]
        %v520 = vld [vmem:[#allocation4 + $0x698] sm:$0xff]
        %v521 = vld [vmem:[#allocation4 + $0x6a0] sm:$0xff]
        %v522 = vld [vmem:[#allocation4 + $0x6a8] sm:$0xff]
        %v523 = vld [vmem:[#allocation4 + $0x6b0] sm:$0xff]
        %v524 = vld [vmem:[#allocation4 + $0x6b8] sm:$0xff]
        %v525 = vld [vmem:[#allocation4 + $0x6c0] sm:$0xff]
        %v526 = vld [vmem:[#allocation4 + $0x6c8] sm:$0xff]
        %v527 = vld [vmem:[#allocation4 + $0x6d0] sm:$0xff]
        %v528 = vld [vmem:[#allocation4 + $0x6d8] sm:$0xff]
        %v529 = vld [vmem:[#allocation4 + $0x6e0] sm:$0xff]
        %v530 = vld [vmem:[#allocation4 + $0x6e8] sm:$0xff]
        %v531 = vld [vmem:[#allocation4 + $0x6f0] sm:$0xff]
        %v532 = vld [vmem:[#allocation4 + $0x6f8] sm:$0xff]
        %v533 = vld [vmem:[#allocation4 + $0x700] sm:$0xff]
        %v534 = vld [vmem:[#allocation4 + $0x708] sm:$0xff]
        %v535 = vld [vmem:[#allocation4 + $0x710] sm:$0xff]
        %v536 = vld [vmem:[#allocation4 + $0x718] sm:$0xff]
        %v537 = vld [vmem:[#allocation4 + $0x720] sm:$0xff]
        %v538 = vld [vmem:[#allocation4 + $0x728] sm:$0xff]
        %v539 = vld [vmem:[#allocation4 + $0x730] sm:$0xff]
        %v540 = vld [vmem:[#allocation4 + $0x738] sm:$0xff]
        %v541 = vld [vmem:[#allocation4 + $0x740] sm:$0xff]
        %v542 = vld [vmem:[#allocation4 + $0x748] sm:$0xff]
        %v543 = vld [vmem:[#allocation4 + $0x750] sm:$0xff]
        %v544 = vld [vmem:[#allocation4 + $0x758] sm:$0xff]
        %v545 = vld [vmem:[#allocation4 + $0x760] sm:$0xff]
        %v546 = vld [vmem:[#allocation4 + $0x768] sm:$0xff]
        %v547 = vld [vmem:[#allocation4 + $0x770] sm:$0xff]
        %v548 = vld [vmem:[#allocation4 + $0x778] sm:$0xff]
        %v549 = vld [vmem:[#allocation4 + $0x780] sm:$0xff]
        %v550 = vld [vmem:[#allocation4 + $0x788] sm:$0xff]
        %v551 = vld [vmem:[#allocation4 + $0x790] sm:$0xff]
        %v552 = vld [vmem:[#allocation4 + $0x798] sm:$0xff]
        %v553 = vld [vmem:[#allocation4 + $0x7a0] sm:$0xff]
        %v554 = vld [vmem:[#allocation4 + $0x7a8] sm:$0xff]
        %v555 = vld [vmem:[#allocation4 + $0x7b0] sm:$0xff]
        %v556 = vld [vmem:[#allocation4 + $0x7b8] sm:$0xff]
        %v557 = vld [vmem:[#allocation4 + $0x7c0] sm:$0xff]
        %v558 = vld [vmem:[#allocation4 + $0x7c8] sm:$0xff]
        %v559 = vld [vmem:[#allocation4 + $0x7d0] sm:$0xff]
        %v560 = vld [vmem:[#allocation4 + $0x7d8] sm:$0xff]
        %v561 = vld [vmem:[#allocation4 + $0x7e0] sm:$0xff]
        %v562 = vld [vmem:[#allocation4 + $0x7e8] sm:$0xff]
        %v563 = vld [vmem:[#allocation4 + $0x7f0] sm:$0xff]
        %v564 = vld [vmem:[#allocation4 + $0x7f8] sm:$0xff]
        %v566 = vcombine.high %v308, %v308
        %568 = vmatprep.subr.mxu0 %v310
        %569 = vmatpush1.msra.mxu0 %v309
        %570 = vmatprep.subr.mxu0 %v318
        %571 = vmatpush1.msra.mxu0 %v317
        %572 = vmatprep.subr.mxu0 %v326
        %573 = vmatpush1.msra.mxu0 %v325
        %574 = vmatprep.subr.mxu0 %v334
        %575 = vmatpush1.msra.mxu0 %v333
        %576 = vmatprep.subr.mxu0 %v342
        %577 = vmatpush1.msra.mxu0 %v341
        %578 = vmatprep.subr.mxu0 %v350
        %579 = vmatpush1.msra.mxu0 %v349
        %580 = vmatprep.subr.mxu0 %v358
        %581 = vmatpush1.msra.mxu0 %v357
        %582 = vmatprep.subr.mxu0 %v366
        %583 = vmatpush1.msra.mxu0 %v365
        %584 = vmatprep.subr.mxu0 %v374
        %585 = vmatpush1.msra.mxu0 %v373
        %586 = vmatprep.subr.mxu0 %v382
        %587 = vmatpush1.msra.mxu0 %v381
        %588 = vmatprep.subr.mxu0 %v390
        %589 = vmatpush1.msra.mxu0 %v389
        %590 = vmatprep.subr.mxu0 %v398
        %591 = vmatpush1.msra.mxu0 %v397
        %592 = vmatprep.subr.mxu0 %v406
        %593 = vmatpush1.msra.mxu0 %v405
        %594 = vmatprep.subr.mxu0 %v414
        %595 = vmatpush1.msra.mxu0 %v413
        %596 = vmatprep.subr.mxu0 %v422
        %597 = vmatpush1.msra.mxu0 %v421
        %598 = vmatprep.subr.mxu0 %v430
        %599 = vmatpush1.msra.mxu0 %v429
        %600 = vmatprep.subr.mxu0 %v438
        %601 = vmatpush1.msra.mxu0 %v437
        %602 = vmatprep.subr.mxu0 %v446
        %603 = vmatpush1.msra.mxu0 %v445
        %604 = vmatprep.subr.mxu0 %v454
        %605 = vmatpush1.msra.mxu0 %v453
        %606 = vmatprep.subr.mxu0 %v462
        %607 = vmatpush1.msra.mxu0 %v461
        %608 = vmatprep.subr.mxu0 %v470
        %609 = vmatpush1.msra.mxu0 %v469
        %610 = vmatprep.subr.mxu0 %v478
        %611 = vmatpush1.msra.mxu0 %v477
        %612 = vmatprep.subr.mxu0 %v486
        %613 = vmatpush1.msra.mxu0 %v485
        %614 = vmatprep.subr.mxu0 %v494
        %615 = vmatpush1.msra.mxu0 %v493
        %616 = vmatprep.subr.mxu0 %v502
        %617 = vmatpush1.msra.mxu0 %v501
        %618 = vmatprep.subr.mxu0 %v510
        %619 = vmatpush1.msra.mxu0 %v509
        %620 = vmatprep.subr.mxu0 %v518
        %621 = vmatpush1.msra.mxu0 %v517
        %622 = vmatprep.subr.mxu0 %v526
        %623 = vmatpush1.msra.mxu0 %v525
        %624 = vmatprep.subr.mxu0 %v534
        %625 = vmatpush1.msra.mxu0 %v533
        %626 = vmatprep.subr.mxu0 %v542
        %627 = vmatpush1.msra.mxu0 %v541
        %628 = vmatprep.subr.mxu0 %v550
        %629 = vmatpush1.msra.mxu0 %v549
        %630 = vmatprep.subr.mxu0 %v558
        %631 = vmatpush1.msra.mxu0 %v557
        %632 = vmatprep.mubr.f32.mxu0 %v566
        %633 = vmatmul.mubr.f32.gmra.mrb[0].mxu0 %v308
        %v634 = vpop.f32.mrb[0].mxu0
        %v635 = vadd.f32 0.0, %v634
        %v636 = vpop.f32.mrb[0].mxu0
        %v637 = vadd.f32 0.0, %v636
        %638 = vdwg.mxu0
        %639 = vmatprep.subr.mxu0 %v312
        %640 = vmatpush1.msra.mxu0 %v311
        %641 = vmatprep.subr.mxu0 %v320
        %642 = vmatpush1.msra.mxu0 %v319
        %643 = vmatprep.subr.mxu0 %v328
        %644 = vmatpush1.msra.mxu0 %v327
        %645 = vmatprep.subr.mxu0 %v336
        %646 = vmatpush1.msra.mxu0 %v335
        %647 = vmatprep.subr.mxu0 %v344
        %648 = vmatpush1.msra.mxu0 %v343
        %649 = vmatprep.subr.mxu0 %v352
        %650 = vmatpush1.msra.mxu0 %v351
        %651 = vmatprep.subr.mxu0 %v360
        %652 = vmatpush1.msra.mxu0 %v359
        %653 = vmatprep.subr.mxu0 %v368
        %654 = vmatpush1.msra.mxu0 %v367
        %655 = vmatprep.subr.mxu0 %v376
        %656 = vmatpush1.msra.mxu0 %v375
        %657 = vmatprep.subr.mxu0 %v384
        %658 = vmatpush1.msra.mxu0 %v383
        %659 = vmatprep.subr.mxu0 %v392
        %660 = vmatpush1.msra.mxu0 %v391
        %661 = vmatprep.subr.mxu0 %v400
        %662 = vmatpush1.msra.mxu0 %v399
        %663 = vmatprep.subr.mxu0 %v408
        %664 = vmatpush1.msra.mxu0 %v407
        %665 = vmatprep.subr.mxu0 %v416
        %666 = vmatpush1.msra.mxu0 %v415
        %667 = vmatprep.subr.mxu0 %v424
        %668 = vmatpush1.msra.mxu0 %v423
        %669 = vmatprep.subr.mxu0 %v432
        %670 = vmatpush1.msra.mxu0 %v431
        %671 = vmatprep.subr.mxu0 %v440
        %672 = vmatpush1.msra.mxu0 %v439
        %673 = vmatprep.subr.mxu0 %v448
        %674 = vmatpush1.msra.mxu0 %v447
        %675 = vmatprep.subr.mxu0 %v456
        %676 = vmatpush1.msra.mxu0 %v455
        %677 = vmatprep.subr.mxu0 %v464
        %678 = vmatpush1.msra.mxu0 %v463
        %679 = vmatprep.subr.mxu0 %v472
        %680 = vmatpush1.msra.mxu0 %v471
        %681 = vmatprep.subr.mxu0 %v480
        %682 = vmatpush1.msra.mxu0 %v479
        %683 = vmatprep.subr.mxu0 %v488
        %684 = vmatpush1.msra.mxu0 %v487
        %685 = vmatprep.subr.mxu0 %v496
        %686 = vmatpush1.msra.mxu0 %v495
        %687 = vmatprep.subr.mxu0 %v504
        %688 = vmatpush1.msra.mxu0 %v503
        %689 = vmatprep.subr.mxu0 %v512
        %690 = vmatpush1.msra.mxu0 %v511
        %691 = vmatprep.subr.mxu0 %v520
        %692 = vmatpush1.msra.mxu0 %v519
        %693 = vmatprep.subr.mxu0 %v528
        %694 = vmatpush1.msra.mxu0 %v527
        %695 = vmatprep.subr.mxu0 %v536
        %696 = vmatpush1.msra.mxu0 %v535
        %697 = vmatprep.subr.mxu0 %v544
        %698 = vmatpush1.msra.mxu0 %v543
        %699 = vmatprep.subr.mxu0 %v552
        %700 = vmatpush1.msra.mxu0 %v551
        %701 = vmatprep.subr.mxu0 %v560
        %702 = vmatpush1.msra.mxu0 %v559
        %703 = vmatprep.mubr.f32.mxu0 %v566
        %704 = vmatmul.mubr.f32.gmra.mrb[0].mxu0 %v308
        %v705 = vpop.f32.mrb[0].mxu0
        %v706 = vadd.f32 0.0, %v705
        %v707 = vpop.f32.mrb[0].mxu0
        %v708 = vadd.f32 0.0, %v707
        %709 = vdwg.mxu0
        %710 = vmatprep.subr.mxu0 %v314
        %711 = vmatpush1.msra.mxu0 %v313
        %712 = vmatprep.subr.mxu0 %v322
        %713 = vmatpush1.msra.mxu0 %v321
        %714 = vmatprep.subr.mxu0 %v330
        %715 = vmatpush1.msra.mxu0 %v329
        %716 = vmatprep.subr.mxu0 %v338
        %717 = vmatpush1.msra.mxu0 %v337
        %718 = vmatprep.subr.mxu0 %v346
        %719 = vmatpush1.msra.mxu0 %v345
        %720 = vmatprep.subr.mxu0 %v354
        %721 = vmatpush1.msra.mxu0 %v353
        %722 = vmatprep.subr.mxu0 %v362
        %723 = vmatpush1.msra.mxu0 %v361
        %724 = vmatprep.subr.mxu0 %v370
        %725 = vmatpush1.msra.mxu0 %v369
        %726 = vmatprep.subr.mxu0 %v378
        %727 = vmatpush1.msra.mxu0 %v377
        %728 = vmatprep.subr.mxu0 %v386
        %729 = vmatpush1.msra.mxu0 %v385
        %730 = vmatprep.subr.mxu0 %v394
        %731 = vmatpush1.msra.mxu0 %v393
        %732 = vmatprep.subr.mxu0 %v402
        %733 = vmatpush1.msra.mxu0 %v401
        %734 = vmatprep.subr.mxu0 %v410
        %735 = vmatpush1.msra.mxu0 %v409
        %736 = vmatprep.subr.mxu0 %v418
        %737 = vmatpush1.msra.mxu0 %v417
        %738 = vmatprep.subr.mxu0 %v426
        %739 = vmatpush1.msra.mxu0 %v425
        %740 = vmatprep.subr.mxu0 %v434
        %741 = vmatpush1.msra.mxu0 %v433
        %742 = vmatprep.subr.mxu0 %v442
        %743 = vmatpush1.msra.mxu0 %v441
        %744 = vmatprep.subr.mxu0 %v450
        %745 = vmatpush1.msra.mxu0 %v449
        %746 = vmatprep.subr.mxu0 %v458
        %747 = vmatpush1.msra.mxu0 %v457
        %748 = vmatprep.subr.mxu0 %v466
        %749 = vmatpush1.msra.mxu0 %v465
        %750 = vmatprep.subr.mxu0 %v474
        %751 = vmatpush1.msra.mxu0 %v473
        %752 = vmatprep.subr.mxu0 %v482
        %753 = vmatpush1.msra.mxu0 %v481
        %754 = vmatprep.subr.mxu0 %v490
        %755 = vmatpush1.msra.mxu0 %v489
        %756 = vmatprep.subr.mxu0 %v498
        %757 = vmatpush1.msra.mxu0 %v497
        %758 = vmatprep.subr.mxu0 %v506
        %759 = vmatpush1.msra.mxu0 %v505
        %760 = vmatprep.subr.mxu0 %v514
        %761 = vmatpush1.msra.mxu0 %v513
        %762 = vmatprep.subr.mxu0 %v522
        %763 = vmatpush1.msra.mxu0 %v521
        %764 = vmatprep.subr.mxu0 %v530
        %765 = vmatpush1.msra.mxu0 %v529
        %766 = vmatprep.subr.mxu0 %v538
        %767 = vmatpush1.msra.mxu0 %v537
        %768 = vmatprep.subr.mxu0 %v546
        %769 = vmatpush1.msra.mxu0 %v545
        %770 = vmatprep.subr.mxu0 %v554
        %771 = vmatpush1.msra.mxu0 %v553
        %772 = vmatprep.subr.mxu0 %v562
        %773 = vmatpush1.msra.mxu0 %v561
        %774 = vmatprep.mubr.f32.mxu0 %v566
        %775 = vmatmul.mubr.f32.gmra.mrb[0].mxu0 %v308
        %v776 = vpop.f32.mrb[0].mxu0
        %v777 = vadd.f32 0.0, %v776
        %v778 = vpop.f32.mrb[0].mxu0
        %v779 = vadd.f32 0.0, %v778
        %780 = vdwg.mxu0
        %781 = vmatprep.subr.mxu0 %v316
        %782 = vmatpush1.msra.mxu0 %v315
        %783 = vmatprep.subr.mxu0 %v324
        %784 = vmatpush1.msra.mxu0 %v323
        %785 = vmatprep.subr.mxu0 %v332
        %786 = vmatpush1.msra.mxu0 %v331
        %787 = vmatprep.subr.mxu0 %v340
        %788 = vmatpush1.msra.mxu0 %v339
        %789 = vmatprep.subr.mxu0 %v348
        %790 = vmatpush1.msra.mxu0 %v347
        %791 = vmatprep.subr.mxu0 %v356
        %792 = vmatpush1.msra.mxu0 %v355
        %793 = vmatprep.subr.mxu0 %v364
        %794 = vmatpush1.msra.mxu0 %v363
        %795 = vmatprep.subr.mxu0 %v372
        %796 = vmatpush1.msra.mxu0 %v371
        %797 = vmatprep.subr.mxu0 %v380
        %798 = vmatpush1.msra.mxu0 %v379
        %799 = vmatprep.subr.mxu0 %v388
        %800 = vmatpush1.msra.mxu0 %v387
        %801 = vmatprep.subr.mxu0 %v396
        %802 = vmatpush1.msra.mxu0 %v395
        %803 = vmatprep.subr.mxu0 %v404
        %804 = vmatpush1.msra.mxu0 %v403
        %805 = vmatprep.subr.mxu0 %v412
        %806 = vmatpush1.msra.mxu0 %v411
        %807 = vmatprep.subr.mxu0 %v420
        %808 = vmatpush1.msra.mxu0 %v419
        %809 = vmatprep.subr.mxu0 %v428
        %810 = vmatpush1.msra.mxu0 %v427
        %811 = vmatprep.subr.mxu0 %v436
        %812 = vmatpush1.msra.mxu0 %v435
        %813 = vmatprep.subr.mxu0 %v444
        %814 = vmatpush1.msra.mxu0 %v443
        %815 = vmatprep.subr.mxu0 %v452
        %816 = vmatpush1.msra.mxu0 %v451
        %817 = vmatprep.subr.mxu0 %v460
        %818 = vmatpush1.msra.mxu0 %v459
        %819 = vmatprep.subr.mxu0 %v468
        %820 = vmatpush1.msra.mxu0 %v467
        %821 = vmatprep.subr.mxu0 %v476
        %822 = vmatpush1.msra.mxu0 %v475
        %823 = vmatprep.subr.mxu0 %v484
        %824 = vmatpush1.msra.mxu0 %v483
        %825 = vmatprep.subr.mxu0 %v492
        %826 = vmatpush1.msra.mxu0 %v491
        %827 = vmatprep.subr.mxu0 %v500
        %828 = vmatpush1.msra.mxu0 %v499
        %829 = vmatprep.subr.mxu0 %v508
        %830 = vmatpush1.msra.mxu0 %v507
        %831 = vmatprep.subr.mxu0 %v516
        %832 = vmatpush1.msra.mxu0 %v515
        %833 = vmatprep.subr.mxu0 %v524
        %834 = vmatpush1.msra.mxu0 %v523
        %835 = vmatprep.subr.mxu0 %v532
        %836 = vmatpush1.msra.mxu0 %v531
        %837 = vmatprep.subr.mxu0 %v540
        %838 = vmatpush1.msra.mxu0 %v539
        %839 = vmatprep.subr.mxu0 %v548
        %840 = vmatpush1.msra.mxu0 %v547
        %841 = vmatprep.subr.mxu0 %v556
        %842 = vmatpush1.msra.mxu0 %v555
        %843 = vmatprep.subr.mxu0 %v564
        %844 = vmatpush1.msra.mxu0 %v563
        %845 = vmatprep.mubr.f32.mxu0 %v566
        %846 = vmatmul.mubr.f32.gmra.mrb[0].mxu0 %v308
        %v847 = vpop.f32.mrb[0].mxu0
        %v848 = vadd.f32 0.0, %v847
        %v849 = vpop.f32.mrb[0].mxu0
        %v850 = vadd.f32 0.0, %v849
        %851 = vdwg.mxu0
        %v852 = vld [vmem:[#allocation7] sm:$0xff]
        %v853 = vld [vmem:[#allocation7 + $0x8] sm:$0xff]
        %v854 = vld [vmem:[#allocation7 + $0x10] sm:$0xff]
        %v855 = vld [vmem:[#allocation7 + $0x18] sm:$0xff]
        %v856 = vld [vmem:[#allocation7 + $0x20] sm:$0xff]
        %v857 = vld [vmem:[#allocation7 + $0x28] sm:$0xff]
        %v858 = vld [vmem:[#allocation7 + $0x30] sm:$0xff]
        %v859 = vld [vmem:[#allocation7 + $0x38] sm:$0xff]
        %v860 = vld [vmem:[#allocation7 + $0x40] sm:$0x1]
        %v861 = vld [vmem:[#allocation7 + $0x48] sm:$0x1]
        %v862 = vld [vmem:[#allocation7 + $0x50] sm:$0x1]
        %v863 = vld [vmem:[#allocation7 + $0x58] sm:$0x1]
        %v864 = vld [vmem:[#allocation7 + $0x60] sm:$0x1]
        %v865 = vld [vmem:[#allocation7 + $0x68] sm:$0x1]
        %v866 = vld [vmem:[#allocation7 + $0x70] sm:$0x1]
        %v867 = vld [vmem:[#allocation7 + $0x78] sm:$0x1]
        %vm868 = vcmask 265216
        %869 = vst.msk [vmem:[#allocation2] sm:$0xf] %vm868, 0.0
        %v870 = vlaneseq
        %v871 = vshrl.u32 %v870, 7
        %v872 = vsub.s32 0, %v871
        %v873 = vrot.slane %v852, %v872
        %v874 = vlaneseq
        %v875 = vshrl.u32 %v874, 7
        %v876 = vsub.s32 0, %v875
        %v877 = vrot.slane %v853, %v876
        %v878 = vlaneseq
        %v879 = vshrl.u32 %v878, 7
        %v880 = vsub.s32 0, %v879
        %v881 = vrot.slane %v854, %v880
        %v882 = vlaneseq
        %v883 = vshrl.u32 %v882, 7
        %v884 = vsub.s32 0, %v883
        %v885 = vrot.slane %v855, %v884
        %v886 = vlaneseq
        %v887 = vshrl.u32 %v886, 7
        %v888 = vsub.s32 0, %v887
        %v889 = vrot.slane %v856, %v888
        %v890 = vlaneseq
        %v891 = vshrl.u32 %v890, 7
        %v892 = vsub.s32 0, %v891
        %v893 = vrot.slane %v857, %v892
        %v894 = vlaneseq
        %v895 = vshrl.u32 %v894, 7
        %v896 = vsub.s32 0, %v895
        %v897 = vrot.slane %v858, %v896
        %v898 = vlaneseq
        %v899 = vshrl.u32 %v898, 7
        %v900 = vsub.s32 0, %v899
        %v901 = vrot.slane %v859, %v900
        %910 = vrot.lane.b32.xlu0 %v873, 95
        %v911 = vpop.permute.xlu0 %910
        %912 = vrot.lane.b32.xlu0 %v877, 95
        %v913 = vpop.permute.xlu0 %912
        %914 = vrot.lane.b32.xlu0 %v881, 95
        %v915 = vpop.permute.xlu0 %914
        %916 = vrot.lane.b32.xlu0 %v885, 95
        %v917 = vpop.permute.xlu0 %916
        %918 = vrot.lane.b32.xlu0 %v889, 95
        %v919 = vpop.permute.xlu0 %918
        %920 = vrot.lane.b32.xlu0 %v893, 95
        %v921 = vpop.permute.xlu0 %920
        %922 = vrot.lane.b32.xlu0 %v897, 95
        %v923 = vpop.permute.xlu0 %922
        %924 = vrot.lane.b32.xlu0 %v901, 95
        %v925 = vpop.permute.xlu0 %924
        %vm926 = vcmask 777216
        %v927 = vsel %vm926, %v911, %v913
        %v928 = vsel %vm926, %v913, %v915
        %v929 = vsel %vm926, %v915, %v917
        %v930 = vsel %vm926, %v917, %v919
        %v931 = vsel %vm926, %v919, %v921
        %v932 = vsel %vm926, %v921, %v923
        %v933 = vsel %vm926, %v923, %v925
        %v942 = vmul.f32 %v635, %v927
        %v943 = vmul.f32 %v637, %v928
        %v944 = vmul.f32 %v706, %v929
        %v945 = vmul.f32 %v708, %v930
        %v946 = vmul.f32 %v777, %v931
        %v947 = vmul.f32 %v779, %v932
        %v948 = vmul.f32 %v848, %v933
        %v949 = vmul.f32 %v850, %v925
        %958 = vrot.lane.b32.xlu0 %v942, 33
        %v959 = vpop.permute.xlu0 %958
        %960 = vrot.lane.b32.xlu0 %v943, 33
        %v961 = vpop.permute.xlu0 %960
        %962 = vrot.lane.b32.xlu0 %v944, 33
        %v963 = vpop.permute.xlu0 %962
        %964 = vrot.lane.b32.xlu0 %v945, 33
        %v965 = vpop.permute.xlu0 %964
        %966 = vrot.lane.b32.xlu0 %v946, 33
        %v967 = vpop.permute.xlu0 %966
        %968 = vrot.lane.b32.xlu0 %v947, 33
        %v969 = vpop.permute.xlu0 %968
        %970 = vrot.lane.b32.xlu0 %v948, 33
        %v971 = vpop.permute.xlu0 %970
        %972 = vrot.lane.b32.xlu0 %v949, 33
        %v973 = vpop.permute.xlu0 %972
        %vm974 = vcmask 269312
        %v975 = vsel %vm974, %v959, %v961
        %v976 = vsel %vm974, %v961, %v963
        %v977 = vsel %vm974, %v963, %v965
        %v978 = vsel %vm974, %v965, %v967
        %v979 = vsel %vm974, %v967, %v969
        %v980 = vsel %vm974, %v969, %v971
        %v981 = vsel %vm974, %v971, %v973
        %vm990 = vcmask 1043720
        %991 = vst.msk [vmem:[#allocation2] sm:$0xf] %vm990, %v959
        %992 = vst [vmem:[#allocation2 + $0x8] sm:$0xf] %v975
        %993 = vst [vmem:[#allocation2 + $0x10] sm:$0xf] %v976
        %994 = vst [vmem:[#allocation2 + $0x18] sm:$0xf] %v977
        %995 = vst [vmem:[#allocation2 + $0x20] sm:$0xf] %v978
        %996 = vst [vmem:[#allocation2 + $0x28] sm:$0xf] %v979
        %997 = vst [vmem:[#allocation2 + $0x30] sm:$0xf] %v980
        %998 = vst [vmem:[#allocation2 + $0x38] sm:$0xf] %v981
        %vm999 = vcmask 261124
        %1000 = vst.msk [vmem:[#allocation2] sm:$0xf0] %vm999, 0.0
        %v1001 = vlaneseq
        %v1002 = vshrl.u32 %v1001, 7
        %v1003 = vsub.s32 1, %v1002
        %v1004 = vrot.slane %v852, %v1003
        %v1005 = vlaneseq
        %v1006 = vshrl.u32 %v1005, 7
        %v1007 = vsub.s32 1, %v1006
        %v1008 = vrot.slane %v853, %v1007
        %v1009 = vlaneseq
        %v1010 = vshrl.u32 %v1009, 7
        %v1011 = vsub.s32 1, %v1010
        %v1012 = vrot.slane %v854, %v1011
        %v1013 = vlaneseq
        %v1014 = vshrl.u32 %v1013, 7
        %v1015 = vsub.s32 1, %v1014
        %v1016 = vrot.slane %v855, %v1015
        %v1017 = vlaneseq
        %v1018 = vshrl.u32 %v1017, 7
        %v1019 = vsub.s32 1, %v1018
        %v1020 = vrot.slane %v856, %v1019
        %v1021 = vlaneseq
        %v1022 = vshrl.u32 %v1021, 7
        %v1023 = vsub.s32 1, %v1022
        %v1024 = vrot.slane %v857, %v1023
        %v1025 = vlaneseq
        %v1026 = vshrl.u32 %v1025, 7
        %v1027 = vsub.s32 1, %v1026
        %v1028 = vrot.slane %v858, %v1027
        %v1029 = vlaneseq
        %v1030 = vshrl.u32 %v1029, 7
        %v1031 = vsub.s32 1, %v1030
        %v1032 = vrot.slane %v859, %v1031
        %1041 = vrot.lane.b32.xlu0 %v1004, 96
        %v1042 = vpop.permute.xlu0 %1041
        %1043 = vrot.lane.b32.xlu0 %v1008, 96
        %v1044 = vpop.permute.xlu0 %1043
        %1045 = vrot.lane.b32.xlu0 %v1012, 96
        %v1046 = vpop.permute.xlu0 %1045
        %1047 = vrot.lane.b32.xlu0 %v1016, 96
        %v1048 = vpop.permute.xlu0 %1047
        %1049 = vrot.lane.b32.xlu0 %v1020, 96
        %v1050 = vpop.permute.xlu0 %1049
        %1051 = vrot.lane.b32.xlu0 %v1024, 96
        %v1052 = vpop.permute.xlu0 %1051
        %1053 = vrot.lane.b32.xlu0 %v1028, 96
        %v1054 = vpop.permute.xlu0 %1053
        %1055 = vrot.lane.b32.xlu0 %v1032, 96
        %v1056 = vpop.permute.xlu0 %1055
        %vm1057 = vcmask 785408
        %v1058 = vsel %vm1057, %v1042, %v1044
        %v1059 = vsel %vm1057, %v1044, %v1046
        %v1060 = vsel %vm1057, %v1046, %v1048
        %v1061 = vsel %vm1057, %v1048, %v1050
        %v1062 = vsel %vm1057, %v1050, %v1052
        %v1063 = vsel %vm1057, %v1052, %v1054
        %v1064 = vsel %vm1057, %v1054, %v1056
        %v1073 = vmul.f32 %v635, %v1058
        %v1074 = vmul.f32 %v637, %v1059
        %v1075 = vmul.f32 %v706, %v1060
        %v1076 = vmul.f32 %v708, %v1061
        %v1077 = vmul.f32 %v777, %v1062
        %v1078 = vmul.f32 %v779, %v1063
        %v1079 = vmul.f32 %v848, %v1064
        %v1080 = vmul.f32 %v850, %v1056
        %v1089 = vrot.slane %v1073, 4
        %v1090 = vrot.slane %v1074, 4
        %v1091 = vrot.slane %v1075, 4
        %v1092 = vrot.slane %v1076, 4
        %v1093 = vrot.slane %v1077, 4
        %v1094 = vrot.slane %v1078, 4
        %v1095 = vrot.slane %v1079, 4
        %v1096 = vrot.slane %v1080, 4
        %1097 = vrot.lane.b32.xlu0 %v1089, 32
        %v1098 = vpop.permute.xlu0 %1097
        %1099 = vrot.lane.b32.xlu0 %v1090, 32
        %v1100 = vpop.permute.xlu0 %1099
        %1101 = vrot.lane.b32.xlu0 %v1091, 32
        %v1102 = vpop.permute.xlu0 %1101
        %1103 = vrot.lane.b32.xlu0 %v1092, 32
        %v1104 = vpop.permute.xlu0 %1103
        %1105 = vrot.lane.b32.xlu0 %v1093, 32
        %v1106 = vpop.permute.xlu0 %1105
        %1107 = vrot.lane.b32.xlu0 %v1094, 32
        %v1108 = vpop.permute.xlu0 %1107
        %1109 = vrot.lane.b32.xlu0 %v1095, 32
        %v1110 = vpop.permute.xlu0 %1109
        %1111 = vrot.lane.b32.xlu0 %v1096, 32
        %v1112 = vpop.permute.xlu0 %1111
        %vm1113 = vcmask 261120
        %v1114 = vsel %vm1113, %v1098, %v1100
        %v1115 = vsel %vm1113, %v1100, %v1102
        %v1116 = vsel %vm1113, %v1102, %v1104
        %v1117 = vsel %vm1113, %v1104, %v1106
        %v1118 = vsel %vm1113, %v1106, %v1108
        %v1119 = vsel %vm1113, %v1108, %v1110
        %v1120 = vsel %vm1113, %v1110, %v1112
        %vm1129 = vcmask 1047812
        %1130 = vst.msk [vmem:[#allocation2] sm:$0xf0] %vm1129, %v1098
        %1131 = vst [vmem:[#allocation2 + $0x8] sm:$0xf0] %v1114
        %1132 = vst [vmem:[#allocation2 + $0x10] sm:$0xf0] %v1115
        %1133 = vst [vmem:[#allocation2 + $0x18] sm:$0xf0] %v1116
        %1134 = vst [vmem:[#allocation2 + $0x20] sm:$0xf0] %v1117
        %1135 = vst [vmem:[#allocation2 + $0x28] sm:$0xf0] %v1118
        %1136 = vst [vmem:[#allocation2 + $0x30] sm:$0xf0] %v1119
        %1137 = vst [vmem:[#allocation2 + $0x38] sm:$0xf0] %v1120
        %vm1138 = vcmask 248832
        %1139 = vst.msk [vmem:[#allocation2 + $0x40] sm:$0xf] %vm1138, 0.0
        %v1140 = vlaneseq
        %v1141 = vshrl.u32 %v1140, 7
        %v1142 = vsub.s32 2, %v1141
        %v1143 = vrot.slane %v852, %v1142
        %v1144 = vlaneseq
        %v1145 = vshrl.u32 %v1144, 7
        %v1146 = vsub.s32 2, %v1145
        %v1147 = vrot.slane %v853, %v1146
        %v1148 = vlaneseq
        %v1149 = vshrl.u32 %v1148, 7
        %v1150 = vsub.s32 2, %v1149
        %v1151 = vrot.slane %v854, %v1150
        %v1152 = vlaneseq
        %v1153 = vshrl.u32 %v1152, 7
        %v1154 = vsub.s32 2, %v1153
        %v1155 = vrot.slane %v855, %v1154
        %v1156 = vlaneseq
        %v1157 = vshrl.u32 %v1156, 7
        %v1158 = vsub.s32 2, %v1157
        %v1159 = vrot.slane %v856, %v1158
        %v1160 = vlaneseq
        %v1161 = vshrl.u32 %v1160, 7
        %v1162 = vsub.s32 2, %v1161
        %v1163 = vrot.slane %v857, %v1162
        %v1164 = vlaneseq
        %v1165 = vshrl.u32 %v1164, 7
        %v1166 = vsub.s32 2, %v1165
        %v1167 = vrot.slane %v858, %v1166
        %v1168 = vlaneseq
        %v1169 = vshrl.u32 %v1168, 7
        %v1170 = vsub.s32 2, %v1169
        %v1171 = vrot.slane %v859, %v1170
        %1180 = vrot.lane.b32.xlu0 %v1143, 97
        %v1181 = vpop.permute.xlu0 %1180
        %1182 = vrot.lane.b32.xlu0 %v1147, 97
        %v1183 = vpop.permute.xlu0 %1182
        %1184 = vrot.lane.b32.xlu0 %v1151, 97
        %v1185 = vpop.permute.xlu0 %1184
        %1186 = vrot.lane.b32.xlu0 %v1155, 97
        %v1187 = vpop.permute.xlu0 %1186
        %1188 = vrot.lane.b32.xlu0 %v1159, 97
        %v1189 = vpop.permute.xlu0 %1188
        %1190 = vrot.lane.b32.xlu0 %v1163, 97
        %v1191 = vpop.permute.xlu0 %1190
        %1192 = vrot.lane.b32.xlu0 %v1167, 97
        %v1193 = vpop.permute.xlu0 %1192
        %1194 = vrot.lane.b32.xlu0 %v1171, 97
        %v1195 = vpop.permute.xlu0 %1194
        %vm1196 = vcmask 793600
        %v1197 = vsel %vm1196, %v1181, %v1183
        %v1198 = vsel %vm1196, %v1183, %v1185
        %v1199 = vsel %vm1196, %v1185, %v1187
        %v1200 = vsel %vm1196, %v1187, %v1189
        %v1201 = vsel %vm1196, %v1189, %v1191
        %v1202 = vsel %vm1196, %v1191, %v1193
        %v1203 = vsel %vm1196, %v1193, %v1195
        %v1212 = vmul.f32 %v635, %v1197
        %v1213 = vmul.f32 %v637, %v1198
        %v1214 = vmul.f32 %v706, %v1199
        %v1215 = vmul.f32 %v708, %v1200
        %v1216 = vmul.f32 %v777, %v1201
        %v1217 = vmul.f32 %v779, %v1202
        %v1218 = vmul.f32 %v848, %v1203
        %v1219 = vmul.f32 %v850, %v1195
        %1228 = vrot.lane.b32.xlu0 %v1212, 31
        %v1229 = vpop.permute.xlu0 %1228
        %1230 = vrot.lane.b32.xlu0 %v1213, 31
        %v1231 = vpop.permute.xlu0 %1230
        %1232 = vrot.lane.b32.xlu0 %v1214, 31
        %v1233 = vpop.permute.xlu0 %1232
        %1234 = vrot.lane.b32.xlu0 %v1215, 31
        %v1235 = vpop.permute.xlu0 %1234
        %1236 = vrot.lane.b32.xlu0 %v1216, 31
        %v1237 = vpop.permute.xlu0 %1236
        %1238 = vrot.lane.b32.xlu0 %v1217, 31
        %v1239 = vpop.permute.xlu0 %1238
        %1240 = vrot.lane.b32.xlu0 %v1218, 31
        %v1241 = vpop.permute.xlu0 %1240
        %1242 = vrot.lane.b32.xlu0 %v1219, 31
        %v1243 = vpop.permute.xlu0 %1242
        %vm1244 = vcmask 252928
        %v1245 = vsel %vm1244, %v1229, %v1231
        %v1246 = vsel %vm1244, %v1231, %v1233
        %v1247 = vsel %vm1244, %v1233, %v1235
        %v1248 = vsel %vm1244, %v1235, %v1237
        %v1249 = vsel %vm1244, %v1237, %v1239
        %v1250 = vsel %vm1244, %v1239, %v1241
        %v1251 = vsel %vm1244, %v1241, %v1243
        %vm1260 = vcmask 1043704
        %1261 = vst.msk [vmem:[#allocation2 + $0x40] sm:$0xf] %vm1260, %v1229
        %1262 = vst [vmem:[#allocation2 + $0x48] sm:$0xf] %v1245
        %1263 = vst [vmem:[#allocation2 + $0x50] sm:$0xf] %v1246
        %1264 = vst [vmem:[#allocation2 + $0x58] sm:$0xf] %v1247
        %1265 = vst [vmem:[#allocation2 + $0x60] sm:$0xf] %v1248
        %1266 = vst [vmem:[#allocation2 + $0x68] sm:$0xf] %v1249
        %1267 = vst [vmem:[#allocation2 + $0x70] sm:$0xf] %v1250
        %1268 = vst [vmem:[#allocation2 + $0x78] sm:$0xf] %v1251
        %vm1269 = vcmask 7172
        %1270 = vst.msk [vmem:[#allocation2 + $0x40] sm:$0xf0] %vm1269, 0.0
        %v1271 = vlaneseq
        %v1272 = vshrl.u32 %v1271, 7
        %v1273 = vsub.s32 3, %v1272
        %v1274 = vrot.slane %v852, %v1273
        %v1275 = vlaneseq
        %v1276 = vshrl.u32 %v1275, 7
        %v1277 = vsub.s32 3, %v1276
        %v1278 = vrot.slane %v853, %v1277
        %v1279 = vlaneseq
        %v1280 = vshrl.u32 %v1279, 7
        %v1281 = vsub.s32 3, %v1280
        %v1282 = vrot.slane %v854, %v1281
        %v1283 = vlaneseq
        %v1284 = vshrl.u32 %v1283, 7
        %v1285 = vsub.s32 3, %v1284
        %v1286 = vrot.slane %v855, %v1285
        %v1287 = vlaneseq
        %v1288 = vshrl.u32 %v1287, 7
        %v1289 = vsub.s32 3, %v1288
        %v1290 = vrot.slane %v856, %v1289
        %v1291 = vlaneseq
        %v1292 = vshrl.u32 %v1291, 7
        %v1293 = vsub.s32 3, %v1292
        %v1294 = vrot.slane %v857, %v1293
        %v1295 = vlaneseq
        %v1296 = vshrl.u32 %v1295, 7
        %v1297 = vsub.s32 3, %v1296
        %v1298 = vrot.slane %v858, %v1297
        %v1299 = vlaneseq
        %v1300 = vshrl.u32 %v1299, 7
        %v1301 = vsub.s32 3, %v1300
        %v1302 = vrot.slane %v859, %v1301
        %1311 = vrot.lane.b32.xlu0 %v1274, 127
        %v1312 = vpop.permute.xlu0 %1311
        %1313 = vrot.lane.b32.xlu0 %v1278, 127
        %v1314 = vpop.permute.xlu0 %1313
        %1315 = vrot.lane.b32.xlu0 %v1282, 127
        %v1316 = vpop.permute.xlu0 %1315
        %1317 = vrot.lane.b32.xlu0 %v1286, 127
        %v1318 = vpop.permute.xlu0 %1317
        %1319 = vrot.lane.b32.xlu0 %v1290, 127
        %v1320 = vpop.permute.xlu0 %1319
        %1321 = vrot.lane.b32.xlu0 %v1294, 127
        %v1322 = vpop.permute.xlu0 %1321
        %1323 = vrot.lane.b32.xlu0 %v1298, 127
        %v1324 = vpop.permute.xlu0 %1323
        %1325 = vrot.lane.b32.xlu0 %v1302, 127
        %v1326 = vpop.permute.xlu0 %1325
        %vm1327 = vcmask 1039360
        %v1328 = vsel %vm1327, %v1312, %v1314
        %v1329 = vsel %vm1327, %v1314, %v1316
        %v1330 = vsel %vm1327, %v1316, %v1318
        %v1331 = vsel %vm1327, %v1318, %v1320
        %v1332 = vsel %vm1327, %v1320, %v1322
        %v1333 = vsel %vm1327, %v1322, %v1324
        %v1334 = vsel %vm1327, %v1324, %v1326
        %v1343 = vmul.f32 %v635, %v1328
        %v1344 = vmul.f32 %v637, %v1329
        %v1345 = vmul.f32 %v706, %v1330
        %v1346 = vmul.f32 %v708, %v1331
        %v1347 = vmul.f32 %v777, %v1332
        %v1348 = vmul.f32 %v779, %v1333
        %v1349 = vmul.f32 %v848, %v1334
        %v1350 = vmul.f32 %v850, %v1326
        %v1359 = vrot.slane %v1343, 4
        %v1360 = vrot.slane %v1344, 4
        %v1361 = vrot.slane %v1345, 4
        %v1362 = vrot.slane %v1346, 4
        %v1363 = vrot.slane %v1347, 4
        %v1364 = vrot.slane %v1348, 4
        %v1365 = vrot.slane %v1349, 4
        %v1366 = vrot.slane %v1350, 4
        %1367 = vrot.lane.b32.xlu0 %v1359, 1
        %v1368 = vpop.permute.xlu0 %1367
        %1369 = vrot.lane.b32.xlu0 %v1360, 1
        %v1370 = vpop.permute.xlu0 %1369
        %1371 = vrot.lane.b32.xlu0 %v1361, 1
        %v1372 = vpop.permute.xlu0 %1371
        %1373 = vrot.lane.b32.xlu0 %v1362, 1
        %v1374 = vpop.permute.xlu0 %1373
        %1375 = vrot.lane.b32.xlu0 %v1363, 1
        %v1376 = vpop.permute.xlu0 %1375
        %1377 = vrot.lane.b32.xlu0 %v1364, 1
        %v1378 = vpop.permute.xlu0 %1377
        %1379 = vrot.lane.b32.xlu0 %v1365, 1
        %v1380 = vpop.permute.xlu0 %1379
        %1381 = vrot.lane.b32.xlu0 %v1366, 1
        %v1382 = vpop.permute.xlu0 %1381
        %vm1383 = vcmask 7168
        %v1384 = vsel %vm1383, %v1368, %v1370
        %v1385 = vsel %vm1383, %v1370, %v1372
        %v1386 = vsel %vm1383, %v1372, %v1374
        %v1387 = vsel %vm1383, %v1374, %v1376
        %v1388 = vsel %vm1383, %v1376, %v1378
        %v1389 = vsel %vm1383, %v1378, %v1380
        %v1390 = vsel %vm1383, %v1380, %v1382
        %vm1399 = vcmask 1047564
        %1400 = vst.msk [vmem:[#allocation2 + $0x40] sm:$0xf0] %vm1399, %v1368
        %1401 = vst [vmem:[#allocation2 + $0x48] sm:$0xf0] %v1384
        %1402 = vst [vmem:[#allocation2 + $0x50] sm:$0xf0] %v1385
        %1403 = vst [vmem:[#allocation2 + $0x58] sm:$0xf0] %v1386
        %1404 = vst [vmem:[#allocation2 + $0x60] sm:$0xf0] %v1387
        %1405 = vst [vmem:[#allocation2 + $0x68] sm:$0xf0] %v1388
        %1406 = vst [vmem:[#allocation2 + $0x70] sm:$0xf0] %v1389
        %1407 = vst [vmem:[#allocation2 + $0x78] sm:$0xf0] %v1390
        %v1408 = vlaneseq
        %v1409 = vshrl.u32 %v1408, 7
        %v1410 = vsub.s32 4, %v1409
        %v1411 = vrot.slane %v852, %v1410
        %v1412 = vlaneseq
        %v1413 = vshrl.u32 %v1412, 7
        %v1414 = vsub.s32 4, %v1413
        %v1415 = vrot.slane %v853, %v1414
        %v1416 = vlaneseq
        %v1417 = vshrl.u32 %v1416, 7
        %v1418 = vsub.s32 4, %v1417
        %v1419 = vrot.slane %v854, %v1418
        %v1420 = vlaneseq
        %v1421 = vshrl.u32 %v1420, 7
        %v1422 = vsub.s32 4, %v1421
        %v1423 = vrot.slane %v855, %v1422
        %v1424 = vlaneseq
        %v1425 = vshrl.u32 %v1424, 7
        %v1426 = vsub.s32 4, %v1425
        %v1427 = vrot.slane %v856, %v1426
        %v1428 = vlaneseq
        %v1429 = vshrl.u32 %v1428, 7
        %v1430 = vsub.s32 4, %v1429
        %v1431 = vrot.slane %v857, %v1430
        %v1432 = vlaneseq
        %v1433 = vshrl.u32 %v1432, 7
        %v1434 = vsub.s32 4, %v1433
        %v1435 = vrot.slane %v858, %v1434
        %v1436 = vlaneseq
        %v1437 = vshrl.u32 %v1436, 7
        %v1438 = vsub.s32 4, %v1437
        %v1439 = vrot.slane %v859, %v1438
        %v1440 = vmul.f32 %v635, %v1411
        %v1441 = vmul.f32 %v637, %v1415
        %v1442 = vmul.f32 %v706, %v1419
        %v1443 = vmul.f32 %v708, %v1423
        %v1444 = vmul.f32 %v777, %v1427
        %v1445 = vmul.f32 %v779, %v1431
        %v1446 = vmul.f32 %v848, %v1435
        %v1447 = vmul.f32 %v850, %v1439
        %1448 = vst [vmem:[#allocation2 + $0x80] sm:$0xf] %v1440
        %1449 = vst [vmem:[#allocation2 + $0x88] sm:$0xf] %v1441
        %1450 = vst [vmem:[#allocation2 + $0x90] sm:$0xf] %v1442
        %1451 = vst [vmem:[#allocation2 + $0x98] sm:$0xf] %v1443
        %1452 = vst [vmem:[#allocation2 + $0xa0] sm:$0xf] %v1444
        %1453 = vst [vmem:[#allocation2 + $0xa8] sm:$0xf] %v1445
        %1454 = vst [vmem:[#allocation2 + $0xb0] sm:$0xf] %v1446
        %1455 = vst [vmem:[#allocation2 + $0xb8] sm:$0xf] %v1447
        %vm1456 = vcmask 1048572
        %1457 = vst.msk [vmem:[#allocation2 + $0xb8] sm:$0xf0] %vm1456, 0.0
        %v1458 = vlaneseq
        %v1459 = vshrl.u32 %v1458, 7
        %v1460 = vsub.s32 5, %v1459
        %v1461 = vrot.slane %v852, %v1460
        %v1462 = vlaneseq
        %v1463 = vshrl.u32 %v1462, 7
        %v1464 = vsub.s32 5, %v1463
        %v1465 = vrot.slane %v853, %v1464
        %v1466 = vlaneseq
        %v1467 = vshrl.u32 %v1466, 7
        %v1468 = vsub.s32 5, %v1467
        %v1469 = vrot.slane %v854, %v1468
        %v1470 = vlaneseq
        %v1471 = vshrl.u32 %v1470, 7
        %v1472 = vsub.s32 5, %v1471
        %v1473 = vrot.slane %v855, %v1472
        %v1474 = vlaneseq
        %v1475 = vshrl.u32 %v1474, 7
        %v1476 = vsub.s32 5, %v1475
        %v1477 = vrot.slane %v856, %v1476
        %v1478 = vlaneseq
        %v1479 = vshrl.u32 %v1478, 7
        %v1480 = vsub.s32 5, %v1479
        %v1481 = vrot.slane %v857, %v1480
        %v1482 = vlaneseq
        %v1483 = vshrl.u32 %v1482, 7
        %v1484 = vsub.s32 5, %v1483
        %v1485 = vrot.slane %v858, %v1484
        %v1486 = vlaneseq
        %v1487 = vshrl.u32 %v1486, 7
        %v1488 = vsub.s32 5, %v1487
        %v1489 = vrot.slane %v859, %v1488
        %1498 = vrot.lane.b32.xlu0 %v1461, 1
        %v1499 = vpop.permute.xlu0 %1498
        %1500 = vrot.lane.b32.xlu0 %v1465, 1
        %v1501 = vpop.permute.xlu0 %1500
        %1502 = vrot.lane.b32.xlu0 %v1469, 1
        %v1503 = vpop.permute.xlu0 %1502
        %1504 = vrot.lane.b32.xlu0 %v1473, 1
        %v1505 = vpop.permute.xlu0 %1504
        %1506 = vrot.lane.b32.xlu0 %v1477, 1
        %v1507 = vpop.permute.xlu0 %1506
        %1508 = vrot.lane.b32.xlu0 %v1481, 1
        %v1509 = vpop.permute.xlu0 %1508
        %1510 = vrot.lane.b32.xlu0 %v1485, 1
        %v1511 = vpop.permute.xlu0 %1510
        %1512 = vrot.lane.b32.xlu0 %v1489, 1
        %v1513 = vpop.permute.xlu0 %1512
        %v1514 = vsel %vm1383, %v1499, %v1501
        %v1515 = vsel %vm1383, %v1501, %v1503
        %v1516 = vsel %vm1383, %v1503, %v1505
        %v1517 = vsel %vm1383, %v1505, %v1507
        %v1518 = vsel %vm1383, %v1507, %v1509
        %v1519 = vsel %vm1383, %v1509, %v1511
        %v1520 = vsel %vm1383, %v1511, %v1513
        %v1529 = vmul.f32 %v635, %v1499
        %v1530 = vmul.f32 %v637, %v1514
        %v1531 = vmul.f32 %v706, %v1515
        %v1532 = vmul.f32 %v708, %v1516
        %v1533 = vmul.f32 %v777, %v1517
        %v1534 = vmul.f32 %v779, %v1518
        %v1535 = vmul.f32 %v848, %v1519
        %v1536 = vmul.f32 %v850, %v1520
        %v1545 = vrot.slane %v1529, 4
        %v1546 = vrot.slane %v1530, 4
        %v1547 = vrot.slane %v1531, 4
        %v1548 = vrot.slane %v1532, 4
        %v1549 = vrot.slane %v1533, 4
        %v1550 = vrot.slane %v1534, 4
        %v1551 = vrot.slane %v1535, 4
        %v1552 = vrot.slane %v1536, 4
        %1553 = vrot.lane.b32.xlu0 %v1545, 127
        %v1554 = vpop.permute.xlu0 %1553
        %1555 = vrot.lane.b32.xlu0 %v1546, 127
        %v1556 = vpop.permute.xlu0 %1555
        %1557 = vrot.lane.b32.xlu0 %v1547, 127
        %v1558 = vpop.permute.xlu0 %1557
        %1559 = vrot.lane.b32.xlu0 %v1548, 127
        %v1560 = vpop.permute.xlu0 %1559
        %1561 = vrot.lane.b32.xlu0 %v1549, 127
        %v1562 = vpop.permute.xlu0 %1561
        %1563 = vrot.lane.b32.xlu0 %v1550, 127
        %v1564 = vpop.permute.xlu0 %1563
        %1565 = vrot.lane.b32.xlu0 %v1551, 127
        %v1566 = vpop.permute.xlu0 %1565
        %1567 = vrot.lane.b32.xlu0 %v1552, 127
        %v1568 = vpop.permute.xlu0 %1567
        %v1569 = vsel %vm1327, %v1554, %v1556
        %v1570 = vsel %vm1327, %v1556, %v1558
        %v1571 = vsel %vm1327, %v1558, %v1560
        %v1572 = vsel %vm1327, %v1560, %v1562
        %v1573 = vsel %vm1327, %v1562, %v1564
        %v1574 = vsel %vm1327, %v1564, %v1566
        %v1575 = vsel %vm1327, %v1566, %v1568
        %1584 = vst [vmem:[#allocation2 + $0x80] sm:$0xf0] %v1569
        %1585 = vst [vmem:[#allocation2 + $0x88] sm:$0xf0] %v1570
        %1586 = vst [vmem:[#allocation2 + $0x90] sm:$0xf0] %v1571
        %1587 = vst [vmem:[#allocation2 + $0x98] sm:$0xf0] %v1572
        %1588 = vst [vmem:[#allocation2 + $0xa0] sm:$0xf0] %v1573
        %1589 = vst [vmem:[#allocation2 + $0xa8] sm:$0xf0] %v1574
        %1590 = vst [vmem:[#allocation2 + $0xb0] sm:$0xf0] %v1575
        %vm1591 = vcmask 1039364
        %1592 = vst.msk [vmem:[#allocation2 + $0xb8] sm:$0xf0] %vm1591, %v1568
        %vm1593 = vcmask 1044232
        %1594 = vst.msk [vmem:[#allocation2 + $0xf8] sm:$0xf] %vm1593, 0.0
        %v1595 = vlaneseq
        %v1596 = vshrl.u32 %v1595, 7
        %v1597 = vsub.s32 6, %v1596
        %v1598 = vrot.slane %v852, %v1597
        %v1599 = vlaneseq
        %v1600 = vshrl.u32 %v1599, 7
        %v1601 = vsub.s32 6, %v1600
        %v1602 = vrot.slane %v853, %v1601
        %v1603 = vlaneseq
        %v1604 = vshrl.u32 %v1603, 7
        %v1605 = vsub.s32 6, %v1604
        %v1606 = vrot.slane %v854, %v1605
        %v1607 = vlaneseq
        %v1608 = vshrl.u32 %v1607, 7
        %v1609 = vsub.s32 6, %v1608
        %v1610 = vrot.slane %v855, %v1609
        %v1611 = vlaneseq
        %v1612 = vshrl.u32 %v1611, 7
        %v1613 = vsub.s32 6, %v1612
        %v1614 = vrot.slane %v856, %v1613
        %v1615 = vlaneseq
        %v1616 = vshrl.u32 %v1615, 7
        %v1617 = vsub.s32 6, %v1616
        %v1618 = vrot.slane %v857, %v1617
        %v1619 = vlaneseq
        %v1620 = vshrl.u32 %v1619, 7
        %v1621 = vsub.s32 6, %v1620
        %v1622 = vrot.slane %v858, %v1621
        %v1623 = vlaneseq
        %v1624 = vshrl.u32 %v1623, 7
        %v1625 = vsub.s32 6, %v1624
        %v1626 = vrot.slane %v859, %v1625
        %1635 = vrot.lane.b32.xlu0 %v1598, 31
        %v1636 = vpop.permute.xlu0 %1635
        %1637 = vrot.lane.b32.xlu0 %v1602, 31
        %v1638 = vpop.permute.xlu0 %1637
        %1639 = vrot.lane.b32.xlu0 %v1606, 31
        %v1640 = vpop.permute.xlu0 %1639
        %1641 = vrot.lane.b32.xlu0 %v1610, 31
        %v1642 = vpop.permute.xlu0 %1641
        %1643 = vrot.lane.b32.xlu0 %v1614, 31
        %v1644 = vpop.permute.xlu0 %1643
        %1645 = vrot.lane.b32.xlu0 %v1618, 31
        %v1646 = vpop.permute.xlu0 %1645
        %1647 = vrot.lane.b32.xlu0 %v1622, 31
        %v1648 = vpop.permute.xlu0 %1647
        %1649 = vrot.lane.b32.xlu0 %v1626, 31
        %v1650 = vpop.permute.xlu0 %1649
        %v1651 = vsel %vm1244, %v1636, %v1638
        %v1652 = vsel %vm1244, %v1638, %v1640
        %v1653 = vsel %vm1244, %v1640, %v1642
        %v1654 = vsel %vm1244, %v1642, %v1644
        %v1655 = vsel %vm1244, %v1644, %v1646
        %v1656 = vsel %vm1244, %v1646, %v1648
        %v1657 = vsel %vm1244, %v1648, %v1650
        %v1666 = vmul.f32 %v635, %v1636
        %v1667 = vmul.f32 %v637, %v1651
        %v1668 = vmul.f32 %v706, %v1652
        %v1669 = vmul.f32 %v708, %v1653
        %v1670 = vmul.f32 %v777, %v1654
        %v1671 = vmul.f32 %v779, %v1655
        %v1672 = vmul.f32 %v848, %v1656
        %v1673 = vmul.f32 %v850, %v1657
        %1682 = vrot.lane.b32.xlu0 %v1666, 97
        %v1683 = vpop.permute.xlu0 %1682
        %1684 = vrot.lane.b32.xlu0 %v1667, 97
        %v1685 = vpop.permute.xlu0 %1684
        %1686 = vrot.lane.b32.xlu0 %v1668, 97
        %v1687 = vpop.permute.xlu0 %1686
        %1688 = vrot.lane.b32.xlu0 %v1669, 97
        %v1689 = vpop.permute.xlu0 %1688
        %1690 = vrot.lane.b32.xlu0 %v1670, 97
        %v1691 = vpop.permute.xlu0 %1690
        %1692 = vrot.lane.b32.xlu0 %v1671, 97
        %v1693 = vpop.permute.xlu0 %1692
        %1694 = vrot.lane.b32.xlu0 %v1672, 97
        %v1695 = vpop.permute.xlu0 %1694
        %1696 = vrot.lane.b32.xlu0 %v1673, 97
        %v1697 = vpop.permute.xlu0 %1696
        %v1698 = vsel %vm1196, %v1683, %v1685
        %v1699 = vsel %vm1196, %v1685, %v1687
        %v1700 = vsel %vm1196, %v1687, %v1689
        %v1701 = vsel %vm1196, %v1689, %v1691
        %v1702 = vsel %vm1196, %v1691, %v1693
        %v1703 = vsel %vm1196, %v1693, %v1695
        %v1704 = vsel %vm1196, %v1695, %v1697
        %1713 = vst [vmem:[#allocation2 + $0xc0] sm:$0xf] %v1698
        %1714 = vst [vmem:[#allocation2 + $0xc8] sm:$0xf] %v1699
        %1715 = vst [vmem:[#allocation2 + $0xd0] sm:$0xf] %v1700
        %1716 = vst [vmem:[#allocation2 + $0xd8] sm:$0xf] %v1701
        %1717 = vst [vmem:[#allocation2 + $0xe0] sm:$0xf] %v1702
        %1718 = vst [vmem:[#allocation2 + $0xe8] sm:$0xf] %v1703
        %1719 = vst [vmem:[#allocation2 + $0xf0] sm:$0xf] %v1704
        %vm1720 = vcmask 789504
        %1721 = vst.msk [vmem:[#allocation2 + $0xf8] sm:$0xf] %vm1720, %v1697
        %vm1722 = vcmask 1048324
        %1723 = vst.msk [vmem:[#allocation2 + $0xf8] sm:$0xf0] %vm1722, 0.0
        %v1724 = vlaneseq
        %v1725 = vshrl.u32 %v1724, 7
        %v1726 = vsub.s32 7, %v1725
        %v1727 = vrot.slane %v852, %v1726
        %v1728 = vlaneseq
        %v1729 = vshrl.u32 %v1728, 7
        %v1730 = vsub.s32 7, %v1729
        %v1731 = vrot.slane %v853, %v1730
        %v1732 = vlaneseq
        %v1733 = vshrl.u32 %v1732, 7
        %v1734 = vsub.s32 7, %v1733
        %v1735 = vrot.slane %v854, %v1734
        %v1736 = vlaneseq
        %v1737 = vshrl.u32 %v1736, 7
        %v1738 = vsub.s32 7, %v1737
        %v1739 = vrot.slane %v855, %v1738
        %v1740 = vlaneseq
        %v1741 = vshrl.u32 %v1740, 7
        %v1742 = vsub.s32 7, %v1741
        %v1743 = vrot.slane %v856, %v1742
        %v1744 = vlaneseq
        %v1745 = vshrl.u32 %v1744, 7
        %v1746 = vsub.s32 7, %v1745
        %v1747 = vrot.slane %v857, %v1746
        %v1748 = vlaneseq
        %v1749 = vshrl.u32 %v1748, 7
        %v1750 = vsub.s32 7, %v1749
        %v1751 = vrot.slane %v858, %v1750
        %v1752 = vlaneseq
        %v1753 = vshrl.u32 %v1752, 7
        %v1754 = vsub.s32 7, %v1753
        %v1755 = vrot.slane %v859, %v1754
        %1764 = vrot.lane.b32.xlu0 %v1727, 32
        %v1765 = vpop.permute.xlu0 %1764
        %1766 = vrot.lane.b32.xlu0 %v1731, 32
        %v1767 = vpop.permute.xlu0 %1766
        %1768 = vrot.lane.b32.xlu0 %v1735, 32
        %v1769 = vpop.permute.xlu0 %1768
        %1770 = vrot.lane.b32.xlu0 %v1739, 32
        %v1771 = vpop.permute.xlu0 %1770
        %1772 = vrot.lane.b32.xlu0 %v1743, 32
        %v1773 = vpop.permute.xlu0 %1772
        %1774 = vrot.lane.b32.xlu0 %v1747, 32
        %v1775 = vpop.permute.xlu0 %1774
        %1776 = vrot.lane.b32.xlu0 %v1751, 32
        %v1777 = vpop.permute.xlu0 %1776
        %1778 = vrot.lane.b32.xlu0 %v1755, 32
        %v1779 = vpop.permute.xlu0 %1778
        %v1780 = vsel %vm1113, %v1765, %v1767
        %v1781 = vsel %vm1113, %v1767, %v1769
        %v1782 = vsel %vm1113, %v1769, %v1771
        %v1783 = vsel %vm1113, %v1771, %v1773
        %v1784 = vsel %vm1113, %v1773, %v1775
        %v1785 = vsel %vm1113, %v1775, %v1777
        %v1786 = vsel %vm1113, %v1777, %v1779
        %v1795 = vmul.f32 %v635, %v1765
        %v1796 = vmul.f32 %v637, %v1780
        %v1797 = vmul.f32 %v706, %v1781
        %v1798 = vmul.f32 %v708, %v1782
        %v1799 = vmul.f32 %v777, %v1783
        %v1800 = vmul.f32 %v779, %v1784
        %v1801 = vmul.f32 %v848, %v1785
        %v1802 = vmul.f32 %v850, %v1786
        %v1811 = vrot.slane %v1795, 4
        %v1812 = vrot.slane %v1796, 4
        %v1813 = vrot.slane %v1797, 4
        %v1814 = vrot.slane %v1798, 4
        %v1815 = vrot.slane %v1799, 4
        %v1816 = vrot.slane %v1800, 4
        %v1817 = vrot.slane %v1801, 4
        %v1818 = vrot.slane %v1802, 4
        %1819 = vrot.lane.b32.xlu0 %v1811, 96
        %v1820 = vpop.permute.xlu0 %1819
        %1821 = vrot.lane.b32.xlu0 %v1812, 96
        %v1822 = vpop.permute.xlu0 %1821
        %1823 = vrot.lane.b32.xlu0 %v1813, 96
        %v1824 = vpop.permute.xlu0 %1823
        %1825 = vrot.lane.b32.xlu0 %v1814, 96
        %v1826 = vpop.permute.xlu0 %1825
        %1827 = vrot.lane.b32.xlu0 %v1815, 96
        %v1828 = vpop.permute.xlu0 %1827
        %1829 = vrot.lane.b32.xlu0 %v1816, 96
        %v1830 = vpop.permute.xlu0 %1829
        %1831 = vrot.lane.b32.xlu0 %v1817, 96
        %v1832 = vpop.permute.xlu0 %1831
        %1833 = vrot.lane.b32.xlu0 %v1818, 96
        %v1834 = vpop.permute.xlu0 %1833
        %v1835 = vsel %vm1057, %v1820, %v1822
        %v1836 = vsel %vm1057, %v1822, %v1824
        %v1837 = vsel %vm1057, %v1824, %v1826
        %v1838 = vsel %vm1057, %v1826, %v1828
        %v1839 = vsel %vm1057, %v1828, %v1830
        %v1840 = vsel %vm1057, %v1830, %v1832
        %v1841 = vsel %vm1057, %v1832, %v1834
        %1850 = vst [vmem:[#allocation2 + $0xc0] sm:$0xf0] %v1835
        %1851 = vst [vmem:[#allocation2 + $0xc8] sm:$0xf0] %v1836
        %1852 = vst [vmem:[#allocation2 + $0xd0] sm:$0xf0] %v1837
        %1853 = vst [vmem:[#allocation2 + $0xd8] sm:$0xf0] %v1838
        %1854 = vst [vmem:[#allocation2 + $0xe0] sm:$0xf0] %v1839
        %1855 = vst [vmem:[#allocation2 + $0xe8] sm:$0xf0] %v1840
        %1856 = vst [vmem:[#allocation2 + $0xf0] sm:$0xf0] %v1841
        %vm1857 = vcmask 785412
        %1858 = vst.msk [vmem:[#allocation2 + $0xf8] sm:$0xf0] %vm1857, %v1834
        %vm1859 = vcmask 1044216
        %1860 = vst.msk [vmem:[#allocation2 + $0x138] sm:$0xf] %vm1859, 0.0
        %v1861 = vlaneseq
        %v1862 = vshrl.u32 %v1861, 7
        %v1863 = vsub.s32 0, %v1862
        %v1864 = vrot.slane %v860, %v1863
        %v1865 = vlaneseq
        %v1866 = vshrl.u32 %v1865, 7
        %v1867 = vsub.s32 0, %v1866
        %v1868 = vrot.slane %v861, %v1867
        %v1869 = vlaneseq
        %v1870 = vshrl.u32 %v1869, 7
        %v1871 = vsub.s32 0, %v1870
        %v1872 = vrot.slane %v862, %v1871
        %v1873 = vlaneseq
        %v1874 = vshrl.u32 %v1873, 7
        %v1875 = vsub.s32 0, %v1874
        %v1876 = vrot.slane %v863, %v1875
        %v1877 = vlaneseq
        %v1878 = vshrl.u32 %v1877, 7
        %v1879 = vsub.s32 0, %v1878
        %v1880 = vrot.slane %v864, %v1879
        %v1881 = vlaneseq
        %v1882 = vshrl.u32 %v1881, 7
        %v1883 = vsub.s32 0, %v1882
        %v1884 = vrot.slane %v865, %v1883
        %v1885 = vlaneseq
        %v1886 = vshrl.u32 %v1885, 7
        %v1887 = vsub.s32 0, %v1886
        %v1888 = vrot.slane %v866, %v1887
        %v1889 = vlaneseq
        %v1890 = vshrl.u32 %v1889, 7
        %v1891 = vsub.s32 0, %v1890
        %v1892 = vrot.slane %v867, %v1891
        %1901 = vrot.lane.b32.xlu0 %v1864, 33
        %v1902 = vpop.permute.xlu0 %1901
        %1903 = vrot.lane.b32.xlu0 %v1868, 33
        %v1904 = vpop.permute.xlu0 %1903
        %1905 = vrot.lane.b32.xlu0 %v1872, 33
        %v1906 = vpop.permute.xlu0 %1905
        %1907 = vrot.lane.b32.xlu0 %v1876, 33
        %v1908 = vpop.permute.xlu0 %1907
        %1909 = vrot.lane.b32.xlu0 %v1880, 33
        %v1910 = vpop.permute.xlu0 %1909
        %1911 = vrot.lane.b32.xlu0 %v1884, 33
        %v1912 = vpop.permute.xlu0 %1911
        %1913 = vrot.lane.b32.xlu0 %v1888, 33
        %v1914 = vpop.permute.xlu0 %1913
        %1915 = vrot.lane.b32.xlu0 %v1892, 33
        %v1916 = vpop.permute.xlu0 %1915
        %v1917 = vsel %vm974, %v1902, %v1904
        %v1918 = vsel %vm974, %v1904, %v1906
        %v1919 = vsel %vm974, %v1906, %v1908
        %v1920 = vsel %vm974, %v1908, %v1910
        %v1921 = vsel %vm974, %v1910, %v1912
        %v1922 = vsel %vm974, %v1912, %v1914
        %v1923 = vsel %vm974, %v1914, %v1916
        %v1932 = vmul.f32 %v635, %v1902
        %v1933 = vmul.f32 %v637, %v1917
        %v1934 = vmul.f32 %v706, %v1918
        %v1935 = vmul.f32 %v708, %v1919
        %v1936 = vmul.f32 %v777, %v1920
        %v1937 = vmul.f32 %v779, %v1921
        %v1938 = vmul.f32 %v848, %v1922
        %v1939 = vmul.f32 %v850, %v1923
        %1948 = vrot.lane.b32.xlu0 %v1932, 95
        %v1949 = vpop.permute.xlu0 %1948
        %1950 = vrot.lane.b32.xlu0 %v1933, 95
        %v1951 = vpop.permute.xlu0 %1950
        %1952 = vrot.lane.b32.xlu0 %v1934, 95
        %v1953 = vpop.permute.xlu0 %1952
        %1954 = vrot.lane.b32.xlu0 %v1935, 95
        %v1955 = vpop.permute.xlu0 %1954
        %1956 = vrot.lane.b32.xlu0 %v1936, 95
        %v1957 = vpop.permute.xlu0 %1956
        %1958 = vrot.lane.b32.xlu0 %v1937, 95
        %v1959 = vpop.permute.xlu0 %1958
        %1960 = vrot.lane.b32.xlu0 %v1938, 95
        %v1961 = vpop.permute.xlu0 %1960
        %1962 = vrot.lane.b32.xlu0 %v1939, 95
        %v1963 = vpop.permute.xlu0 %1962
        %v1964 = vsel %vm926, %v1949, %v1951
        %v1965 = vsel %vm926, %v1951, %v1953
        %v1966 = vsel %vm926, %v1953, %v1955
        %v1967 = vsel %vm926, %v1955, %v1957
        %v1968 = vsel %vm926, %v1957, %v1959
        %v1969 = vsel %vm926, %v1959, %v1961
        %v1970 = vsel %vm926, %v1961, %v1963
        %1979 = vst [vmem:[#allocation2 + $0x100] sm:$0xf] %v1964
        %1980 = vst [vmem:[#allocation2 + $0x108] sm:$0xf] %v1965
        %1981 = vst [vmem:[#allocation2 + $0x110] sm:$0xf] %v1966
        %1982 = vst [vmem:[#allocation2 + $0x118] sm:$0xf] %v1967
        %1983 = vst [vmem:[#allocation2 + $0x120] sm:$0xf] %v1968
        %1984 = vst [vmem:[#allocation2 + $0x128] sm:$0xf] %v1969
        %1985 = vst [vmem:[#allocation2 + $0x130] sm:$0xf] %v1970
        %vm1986 = vcmask 773120
        %1987 = vst.msk [vmem:[#allocation2 + $0x138] sm:$0xf] %vm1986, %v1963
        %v1988 = vld [vmem:[%s2] sm:$0xff]
        %v1989 = vld [vmem:[#allocation2] sm:$0xff]
        %v1990 = vld [vmem:[#allocation2 + $0x8] sm:$0xff]
        %v1991 = vld [vmem:[#allocation2 + $0x10] sm:$0xff]
        %v1992 = vld [vmem:[#allocation2 + $0x18] sm:$0xff]
        %v1993 = vld [vmem:[#allocation2 + $0x20] sm:$0xff]
        %v1994 = vld [vmem:[#allocation2 + $0x28] sm:$0xff]
        %v1995 = vld [vmem:[#allocation2 + $0x30] sm:$0xff]
        %v1996 = vld [vmem:[#allocation2 + $0x38] sm:$0xff]
        %v1997 = vld [vmem:[#allocation2 + $0x40] sm:$0xff]
        %v1998 = vld [vmem:[#allocation2 + $0x48] sm:$0xff]
        %v1999 = vld [vmem:[#allocation2 + $0x50] sm:$0xff]
        %v2000 = vld [vmem:[#allocation2 + $0x58] sm:$0xff]
        %v2001 = vld [vmem:[#allocation2 + $0x60] sm:$0xff]
        %v2002 = vld [vmem:[#allocation2 + $0x68] sm:$0xff]
        %v2003 = vld [vmem:[#allocation2 + $0x70] sm:$0xff]
        %v2004 = vld [vmem:[#allocation2 + $0x78] sm:$0xff]
        %v2005 = vld [vmem:[#allocation2 + $0x80] sm:$0xff]
        %v2006 = vld [vmem:[#allocation2 + $0x88] sm:$0xff]
        %v2007 = vld [vmem:[#allocation2 + $0x90] sm:$0xff]
        %v2008 = vld [vmem:[#allocation2 + $0x98] sm:$0xff]
        %v2009 = vld [vmem:[#allocation2 + $0xa0] sm:$0xff]
        %v2010 = vld [vmem:[#allocation2 + $0xa8] sm:$0xff]
        %v2011 = vld [vmem:[#allocation2 + $0xb0] sm:$0xff]
        %v2012 = vld [vmem:[#allocation2 + $0xb8] sm:$0xff]
        %v2013 = vld [vmem:[#allocation2 + $0xc0] sm:$0xff]
        %v2014 = vld [vmem:[#allocation2 + $0xc8] sm:$0xff]
        %v2015 = vld [vmem:[#allocation2 + $0xd0] sm:$0xff]
        %v2016 = vld [vmem:[#allocation2 + $0xd8] sm:$0xff]
        %v2017 = vld [vmem:[#allocation2 + $0xe0] sm:$0xff]
        %v2018 = vld [vmem:[#allocation2 + $0xe8] sm:$0xff]
        %v2019 = vld [vmem:[#allocation2 + $0xf0] sm:$0xff]
        %v2020 = vld [vmem:[#allocation2 + $0xf8] sm:$0xff]
        %v2021 = vld [vmem:[#allocation2 + $0x100] sm:$0xf]
        %v2022 = vld [vmem:[#allocation2 + $0x108] sm:$0xf]
        %v2023 = vld [vmem:[#allocation2 + $0x110] sm:$0xf]
        %v2024 = vld [vmem:[#allocation2 + $0x118] sm:$0xf]
        %v2025 = vld [vmem:[#allocation2 + $0x120] sm:$0xf]
        %v2026 = vld [vmem:[#allocation2 + $0x128] sm:$0xf]
        %v2027 = vld [vmem:[#allocation2 + $0x130] sm:$0xf]
        %v2028 = vld [vmem:[#allocation2 + $0x138] sm:$0xf]
        %vm2029 = vcmask 293888
        %v2031 = vsel %vm2029, %v1988, 0
        %vm2033 = vcmask 1043456
        %v2035 = vsel %vm2033, %v2021, 0
        %v2038 = vsel %vm2033, %v2022, 0
        %v2041 = vsel %vm2033, %v2023, 0
        %v2044 = vsel %vm2033, %v2024, 0
        %v2047 = vsel %vm2033, %v2025, 0
        %v2050 = vsel %vm2033, %v2026, 0
        %v2053 = vsel %vm2033, %v2027, 0
        %v2056 = vsel %vm2033, %v2028, 0
        %2058 = vmatprep.subr.mxu0 %v1990
        %2059 = vmatpush1.msra.mxu0 %v1989
        %2060 = vmatprep.subr.mxu0 %v1998
        %2061 = vmatpush1.msra.mxu0 %v1997
        %2062 = vmatprep.subr.mxu0 %v2006
        %2063 = vmatpush1.msra.mxu0 %v2005
        %2064 = vmatprep.subr.mxu0 %v2014
        %2065 = vmatpush1.msra.mxu0 %v2013
        %2066 = vmatprep.subr.mxu0 %v2038
        %2067 = vmatpush1.msra.mxu0 %v2035
        %2068 = vmatprep.subr.mxu0 0.0
        %2069 = vmatpush1.msra.mxu0 0.0
        %2070 = vmatprep.subr.mxu0 0.0
        %2071 = vmatpush1.msra.mxu0 0.0
        %2072 = vmatprep.subr.mxu0 0.0
        %2073 = vmatpush1.msra.mxu0 0.0
        %2074 = vmatprep.subr.mxu0 0.0
        %2075 = vmatpush1.msra.mxu0 0.0
        %2076 = vmatprep.subr.mxu0 0.0
        %2077 = vmatpush1.msra.mxu0 0.0
        %2078 = vmatprep.subr.mxu0 0.0
        %2079 = vmatpush1.msra.mxu0 0.0
        %2080 = vmatprep.subr.mxu0 0.0
        %2081 = vmatpush1.msra.mxu0 0.0
        %2082 = vmatprep.subr.mxu0 0.0
        %2083 = vmatpush1.msra.mxu0 0.0
        %2084 = vmatprep.subr.mxu0 0.0
        %2085 = vmatpush1.msra.mxu0 0.0
        %2086 = vmatprep.subr.mxu0 0.0
        %2087 = vmatpush1.msra.mxu0 0.0
        %2088 = vmatprep.subr.mxu0 0.0
        %2089 = vmatpush1.msra.mxu0 0.0
        %2090 = vmatprep.subr.mxu0 0.0
        %2091 = vmatpush1.msra.mxu0 0.0
        %2092 = vmatprep.subr.mxu0 0.0
        %2093 = vmatpush1.msra.mxu0 0.0
        %2094 = vmatprep.subr.mxu0 0.0
        %2095 = vmatpush1.msra.mxu0 0.0
        %2096 = vmatprep.subr.mxu0 0.0
        %2097 = vmatpush1.msra.mxu0 0.0
        %2098 = vmatprep.subr.mxu0 0.0
        %2099 = vmatpush1.msra.mxu0 0.0
        %2100 = vmatprep.subr.mxu0 0.0
        %2101 = vmatpush1.msra.mxu0 0.0
        %2102 = vmatprep.subr.mxu0 0.0
        %2103 = vmatpush1.msra.mxu0 0.0
        %2104 = vmatprep.subr.mxu0 0.0
        %2105 = vmatpush1.msra.mxu0 0.0
        %2106 = vmatprep.subr.mxu0 0.0
        %2107 = vmatpush1.msra.mxu0 0.0
        %2108 = vmatprep.subr.mxu0 0.0
        %2109 = vmatpush1.msra.mxu0 0.0
        %2110 = vmatprep.subr.mxu0 0.0
        %2111 = vmatpush1.msra.mxu0 0.0
        %2112 = vmatprep.subr.mxu0 0.0
        %2113 = vmatpush1.msra.mxu0 0.0
        %2114 = vmatprep.subr.mxu0 0.0
        %2115 = vmatpush1.msra.mxu0 0.0
        %2116 = vmatprep.subr.mxu0 0.0
        %2117 = vmatpush1.msra.mxu0 0.0
        %2118 = vmatprep.subr.mxu0 0.0
        %2119 = vmatpush1.msra.mxu0 0.0
        %2120 = vmatprep.subr.mxu0 0.0
        %2121 = vmatpush1.msra.mxu0 0.0
        %2122 = vmatprep.mubr.f32.mxu0 0.0
        %2123 = vmatmul.mubr.f32.gmra.mrb[0].mxu0 %v2031
        %v2124 = vpop.f32.mrb[0].mxu0
        %v2125 = vadd.f32 0.0, %v2124
        %v2126 = vpop.f32.mrb[0].mxu0
        %v2127 = vadd.f32 0.0, %v2126
        %2128 = vdwg.mxu0
        %2129 = vmatprep.subr.mxu0 %v1992
        %2130 = vmatpush1.msra.mxu0 %v1991
        %2131 = vmatprep.subr.mxu0 %v2000
        %2132 = vmatpush1.msra.mxu0 %v1999
        %2133 = vmatprep.subr.mxu0 %v2008
        %2134 = vmatpush1.msra.mxu0 %v2007
        %2135 = vmatprep.subr.mxu0 %v2016
        %2136 = vmatpush1.msra.mxu0 %v2015
        %2137 = vmatprep.subr.mxu0 %v2044
        %2138 = vmatpush1.msra.mxu0 %v2041
        %2139 = vmatprep.subr.mxu0 0.0
        %2140 = vmatpush1.msra.mxu0 0.0
        %2141 = vmatprep.subr.mxu0 0.0
        %2142 = vmatpush1.msra.mxu0 0.0
        %2143 = vmatprep.subr.mxu0 0.0
        %2144 = vmatpush1.msra.mxu0 0.0
        %2145 = vmatprep.subr.mxu0 0.0
        %2146 = vmatpush1.msra.mxu0 0.0
        %2147 = vmatprep.subr.mxu0 0.0
        %2148 = vmatpush1.msra.mxu0 0.0
        %2149 = vmatprep.subr.mxu0 0.0
        %2150 = vmatpush1.msra.mxu0 0.0
        %2151 = vmatprep.subr.mxu0 0.0
        %2152 = vmatpush1.msra.mxu0 0.0
        %2153 = vmatprep.subr.mxu0 0.0
        %2154 = vmatpush1.msra.mxu0 0.0
        %2155 = vmatprep.subr.mxu0 0.0
        %2156 = vmatpush1.msra.mxu0 0.0
        %2157 = vmatprep.subr.mxu0 0.0
        %2158 = vmatpush1.msra.mxu0 0.0
        %2159 = vmatprep.subr.mxu0 0.0
        %2160 = vmatpush1.msra.mxu0 0.0
        %2161 = vmatprep.subr.mxu0 0.0
        %2162 = vmatpush1.msra.mxu0 0.0
        %2163 = vmatprep.subr.mxu0 0.0
        %2164 = vmatpush1.msra.mxu0 0.0
        %2165 = vmatprep.subr.mxu0 0.0
        %2166 = vmatpush1.msra.mxu0 0.0
        %2167 = vmatprep.subr.mxu0 0.0
        %2168 = vmatpush1.msra.mxu0 0.0
        %2169 = vmatprep.subr.mxu0 0.0
        %2170 = vmatpush1.msra.mxu0 0.0
        %2171 = vmatprep.subr.mxu0 0.0
        %2172 = vmatpush1.msra.mxu0 0.0
        %2173 = vmatprep.subr.mxu0 0.0
        %2174 = vmatpush1.msra.mxu0 0.0
        %2175 = vmatprep.subr.mxu0 0.0
        %2176 = vmatpush1.msra.mxu0 0.0
        %2177 = vmatprep.subr.mxu0 0.0
        %2178 = vmatpush1.msra.mxu0 0.0
        %2179 = vmatprep.subr.mxu0 0.0
        %2180 = vmatpush1.msra.mxu0 0.0
        %2181 = vmatprep.subr.mxu0 0.0
        %2182 = vmatpush1.msra.mxu0 0.0
        %2183 = vmatprep.subr.mxu0 0.0
        %2184 = vmatpush1.msra.mxu0 0.0
        %2185 = vmatprep.subr.mxu0 0.0
        %2186 = vmatpush1.msra.mxu0 0.0
        %2187 = vmatprep.subr.mxu0 0.0
        %2188 = vmatpush1.msra.mxu0 0.0
        %2189 = vmatprep.subr.mxu0 0.0
        %2190 = vmatpush1.msra.mxu0 0.0
        %2191 = vmatprep.subr.mxu0 0.0
        %2192 = vmatpush1.msra.mxu0 0.0
        %2193 = vmatprep.mubr.f32.mxu0 0.0
        %2194 = vmatmul.mubr.f32.gmra.mrb[0].mxu0 %v2031
        %v2195 = vpop.f32.mrb[0].mxu0
        %v2196 = vadd.f32 0.0, %v2195
        %v2197 = vpop.f32.mrb[0].mxu0
        %v2198 = vadd.f32 0.0, %v2197
        %2199 = vdwg.mxu0
        %2200 = vmatprep.subr.mxu0 %v1994
        %2201 = vmatpush1.msra.mxu0 %v1993
        %2202 = vmatprep.subr.mxu0 %v2002
        %2203 = vmatpush1.msra.mxu0 %v2001
        %2204 = vmatprep.subr.mxu0 %v2010
        %2205 = vmatpush1.msra.mxu0 %v2009
        %2206 = vmatprep.subr.mxu0 %v2018
        %2207 = vmatpush1.msra.mxu0 %v2017
        %2208 = vmatprep.subr.mxu0 %v2050
        %2209 = vmatpush1.msra.mxu0 %v2047
        %2210 = vmatprep.subr.mxu0 0.0
        %2211 = vmatpush1.msra.mxu0 0.0
        %2212 = vmatprep.subr.mxu0 0.0
        %2213 = vmatpush1.msra.mxu0 0.0
        %2214 = vmatprep.subr.mxu0 0.0
        %2215 = vmatpush1.msra.mxu0 0.0
        %2216 = vmatprep.subr.mxu0 0.0
        %2217 = vmatpush1.msra.mxu0 0.0
        %2218 = vmatprep.subr.mxu0 0.0
        %2219 = vmatpush1.msra.mxu0 0.0
        %2220 = vmatprep.subr.mxu0 0.0
        %2221 = vmatpush1.msra.mxu0 0.0
        %2222 = vmatprep.subr.mxu0 0.0
        %2223 = vmatpush1.msra.mxu0 0.0
        %2224 = vmatprep.subr.mxu0 0.0
        %2225 = vmatpush1.msra.mxu0 0.0
        %2226 = vmatprep.subr.mxu0 0.0
        %2227 = vmatpush1.msra.mxu0 0.0
        %2228 = vmatprep.subr.mxu0 0.0
        %2229 = vmatpush1.msra.mxu0 0.0
        %2230 = vmatprep.subr.mxu0 0.0
        %2231 = vmatpush1.msra.mxu0 0.0
        %2232 = vmatprep.subr.mxu0 0.0
        %2233 = vmatpush1.msra.mxu0 0.0
        %2234 = vmatprep.subr.mxu0 0.0
        %2235 = vmatpush1.msra.mxu0 0.0
        %2236 = vmatprep.subr.mxu0 0.0
        %2237 = vmatpush1.msra.mxu0 0.0
        %2238 = vmatprep.subr.mxu0 0.0
        %2239 = vmatpush1.msra.mxu0 0.0
        %2240 = vmatprep.subr.mxu0 0.0
        %2241 = vmatpush1.msra.mxu0 0.0
        %2242 = vmatprep.subr.mxu0 0.0
        %2243 = vmatpush1.msra.mxu0 0.0
        %2244 = vmatprep.subr.mxu0 0.0
        %2245 = vmatpush1.msra.mxu0 0.0
        %2246 = vmatprep.subr.mxu0 0.0
        %2247 = vmatpush1.msra.mxu0 0.0
        %2248 = vmatprep.subr.mxu0 0.0
        %2249 = vmatpush1.msra.mxu0 0.0
        %2250 = vmatprep.subr.mxu0 0.0
        %2251 = vmatpush1.msra.mxu0 0.0
        %2252 = vmatprep.subr.mxu0 0.0
        %2253 = vmatpush1.msra.mxu0 0.0
        %2254 = vmatprep.subr.mxu0 0.0
        %2255 = vmatpush1.msra.mxu0 0.0
        %2256 = vmatprep.subr.mxu0 0.0
        %2257 = vmatpush1.msra.mxu0 0.0
        %2258 = vmatprep.subr.mxu0 0.0
        %2259 = vmatpush1.msra.mxu0 0.0
        %2260 = vmatprep.subr.mxu0 0.0
        %2261 = vmatpush1.msra.mxu0 0.0
        %2262 = vmatprep.subr.mxu0 0.0
        %2263 = vmatpush1.msra.mxu0 0.0
        %2264 = vmatprep.mubr.f32.mxu0 0.0
        %2265 = vmatmul.mubr.f32.gmra.mrb[0].mxu0 %v2031
        %v2266 = vpop.f32.mrb[0].mxu0
        %v2267 = vadd.f32 0.0, %v2266
        %v2268 = vpop.f32.mrb[0].mxu0
        %v2269 = vadd.f32 0.0, %v2268
        %2270 = vdwg.mxu0
        %2271 = vmatprep.subr.mxu0 %v1996
        %2272 = vmatpush1.msra.mxu0 %v1995
        %2273 = vmatprep.subr.mxu0 %v2004
        %2274 = vmatpush1.msra.mxu0 %v2003
        %2275 = vmatprep.subr.mxu0 %v2012
        %2276 = vmatpush1.msra.mxu0 %v2011
        %2277 = vmatprep.subr.mxu0 %v2020
        %2278 = vmatpush1.msra.mxu0 %v2019
        %2279 = vmatprep.subr.mxu0 %v2056
        %2280 = vmatpush1.msra.mxu0 %v2053
        %2281 = vmatprep.subr.mxu0 0.0
        %2282 = vmatpush1.msra.mxu0 0.0
        %2283 = vmatprep.subr.mxu0 0.0
        %2284 = vmatpush1.msra.mxu0 0.0
        %2285 = vmatprep.subr.mxu0 0.0
        %2286 = vmatpush1.msra.mxu0 0.0
        %2287 = vmatprep.subr.mxu0 0.0
        %2288 = vmatpush1.msra.mxu0 0.0
        %2289 = vmatprep.subr.mxu0 0.0
        %2290 = vmatpush1.msra.mxu0 0.0
        %2291 = vmatprep.subr.mxu0 0.0
        %2292 = vmatpush1.msra.mxu0 0.0
        %2293 = vmatprep.subr.mxu0 0.0
        %2294 = vmatpush1.msra.mxu0 0.0
        %2295 = vmatprep.subr.mxu0 0.0
        %2296 = vmatpush1.msra.mxu0 0.0
        %2297 = vmatprep.subr.mxu0 0.0
        %2298 = vmatpush1.msra.mxu0 0.0
        %2299 = vmatprep.subr.mxu0 0.0
        %2300 = vmatpush1.msra.mxu0 0.0
        %2301 = vmatprep.subr.mxu0 0.0
        %2302 = vmatpush1.msra.mxu0 0.0
        %2303 = vmatprep.subr.mxu0 0.0
        %2304 = vmatpush1.msra.mxu0 0.0
        %2305 = vmatprep.subr.mxu0 0.0
        %2306 = vmatpush1.msra.mxu0 0.0
        %2307 = vmatprep.subr.mxu0 0.0
        %2308 = vmatpush1.msra.mxu0 0.0
        %2309 = vmatprep.subr.mxu0 0.0
        %2310 = vmatpush1.msra.mxu0 0.0
        %2311 = vmatprep.subr.mxu0 0.0
        %2312 = vmatpush1.msra.mxu0 0.0
        %2313 = vmatprep.subr.mxu0 0.0
        %2314 = vmatpush1.msra.mxu0 0.0
        %2315 = vmatprep.subr.mxu0 0.0
        %2316 = vmatpush1.msra.mxu0 0.0
        %2317 = vmatprep.subr.mxu0 0.0
        %2318 = vmatpush1.msra.mxu0 0.0
        %2319 = vmatprep.subr.mxu0 0.0
        %2320 = vmatpush1.msra.mxu0 0.0
        %2321 = vmatprep.subr.mxu0 0.0
        %2322 = vmatpush1.msra.mxu0 0.0
        %2323 = vmatprep.subr.mxu0 0.0
        %2324 = vmatpush1.msra.mxu0 0.0
        %2325 = vmatprep.subr.mxu0 0.0
        %2326 = vmatpush1.msra.mxu0 0.0
        %2327 = vmatprep.subr.mxu0 0.0
        %2328 = vmatpush1.msra.mxu0 0.0
        %2329 = vmatprep.subr.mxu0 0.0
        %2330 = vmatpush1.msra.mxu0 0.0
        %2331 = vmatprep.subr.mxu0 0.0
        %2332 = vmatpush1.msra.mxu0 0.0
        %2333 = vmatprep.subr.mxu0 0.0
        %2334 = vmatpush1.msra.mxu0 0.0
        %2335 = vmatprep.mubr.f32.mxu0 0.0
        %2336 = vmatmul.mubr.f32.gmra.mrb[0].mxu0 %v2031
        %v2337 = vpop.f32.mrb[0].mxu0
        %v2338 = vadd.f32 0.0, %v2337
        %v2339 = vpop.f32.mrb[0].mxu0
        %v2340 = vadd.f32 0.0, %v2339
        %2341 = vdwg.mxu0
        %v2342 = vld [vmem:[%s4] sm:$0xff]
        %2344 = vset.pattern.permute.xlu0 0
        %2345 = vperm.xlu0 %2344, %v2342
        %v2346 = vpop.permute.xlu0 %2345
        %v2348 = vmul.f32 %v2125, %v2346
        %v2349 = vmul.f32 %v2127, %v2346
        %v2350 = vmul.f32 %v2196, %v2346
        %v2351 = vmul.f32 %v2198, %v2346
        %v2352 = vmul.f32 %v2267, %v2346
        %v2353 = vmul.f32 %v2269, %v2346
        %v2354 = vmul.f32 %v2338, %v2346
        %v2355 = vmul.f32 %v2340, %v2346
        %v2356 = vld [vmem:[%s5] sm:$0xff]
        %2358 = vset.pattern.permute.xlu0 0
        %2359 = vperm.xlu0 %2358, %v2356
        %v2360 = vpop.permute.xlu0 %2359
        %v2362 = vadd.f32 %v2348, %v2360
        %v2363 = vadd.f32 %v2349, %v2360
        %v2364 = vadd.f32 %v2350, %v2360
        %v2365 = vadd.f32 %v2351, %v2360
        %v2366 = vadd.f32 %v2352, %v2360
        %v2367 = vadd.f32 %v2353, %v2360
        %v2368 = vadd.f32 %v2354, %v2360
        %v2369 = vadd.f32 %v2355, %v2360
        %s2370 = sld [smem:[#allocation3]]
        %vm2371 = vcmp.gt.f32.partialorder %v2362, 0.0
        %vm2372 = vcmp.gt.f32.partialorder %v2363, 0.0
        %vm2373 = vcmp.gt.f32.partialorder %v2364, 0.0
        %vm2374 = vcmp.gt.f32.partialorder %v2365, 0.0
        %vm2375 = vcmp.gt.f32.partialorder %v2366, 0.0
        %vm2376 = vcmp.gt.f32.partialorder %v2367, 0.0
        %vm2377 = vcmp.gt.f32.partialorder %v2368, 0.0
        %vm2378 = vcmp.gt.f32.partialorder %v2369, 0.0
        %v2379 = vstv %s2370
        %v2380 = vmul.f32 %v2379, %v2362
        %v2381 = vmul.f32 %v2379, %v2363
        %v2382 = vmul.f32 %v2379, %v2364
        %v2383 = vmul.f32 %v2379, %v2365
        %v2384 = vmul.f32 %v2379, %v2366
        %v2385 = vmul.f32 %v2379, %v2367
        %v2386 = vmul.f32 %v2379, %v2368
        %v2387 = vmul.f32 %v2379, %v2369
        %v2388 = vsel %vm2371, %v2362, %v2380
        %v2389 = vsel %vm2372, %v2363, %v2381
        %v2390 = vsel %vm2373, %v2364, %v2382
        %v2391 = vsel %vm2374, %v2365, %v2383
        %v2392 = vsel %vm2375, %v2366, %v2384
        %v2393 = vsel %vm2376, %v2367, %v2385
        %v2394 = vsel %vm2377, %v2368, %v2386
        %v2395 = vsel %vm2378, %v2369, %v2387
        %2396 = vst [vmem:[%s302] sm:$0xff] %v2388
        %2397 = vst [vmem:[%s302 + $0x8] sm:$0xff] %v2389
        %2398 = vst [vmem:[%s302 + $0x10] sm:$0xff] %v2390
        %2399 = vst [vmem:[%s302 + $0x18] sm:$0xff] %v2391
        %2400 = vst [vmem:[%s302 + $0x20] sm:$0xff] %v2392
        %2401 = vst [vmem:[%s302 + $0x28] sm:$0xff] %v2393
        %2402 = vst [vmem:[%s302 + $0x30] sm:$0xff] %v2394
        %2403 = vst [vmem:[%s302 + $0x38] sm:$0xff] %v2395
        %s2404 = sand.u32 %s184, 1
        %s2405 = scalar_lea.sflag [#allocation6], %s2404
        %s2406 = sand.u32 %s184, 1
        %s2407 = smul.addr %s2406, 64
        %s2408 = scalar_lea.vmem [#allocation9], %s2407
        // Predicated region
        $region57: #{tpu_custom_call.1} parent=47 // pred_check
          %p2409 = pneg %p194
        $region58: #{tpu_custom_call.1} parent=47 // pred_check_branch
          %2411 = sbr.rel (%p2409) target = $region60
        $region59: #{tpu_custom_call.1} parent=47 // pred_region
          %s2413 = ssub.s32 1024, 1024
          %2414 = vsyncadd %s2405, %s2413
          %s2415 = smul.addr %s24, 8
          %s2416 = smul.addr %s2415, 128
          %s2417 = scalar_lea.hbm %s7, %s2416
          %s2419 = sshll.u32 %s2408, 4
          %s2420 = int_to_ptr.vmem [resolvable:$true] %s2419
          %2422 = dma.vmem_to_hbm [thread:$0]  %s2420, 1024, %s2417, %s2405
        $region60: #{tpu_custom_call.1} parent=47 // pred_fallthru
          _
      $region48: #{tpu_custom_call.1} parent=5 // pred_fallthru
        _
      %p2423 = scmp.le.s32.totalorder 2, %s19
      // Predicated region
      $region61: #{tpu_custom_call.1} parent=5 // pred_check
        %p2424 = pneg %p2423
      $region62: #{tpu_custom_call.1} parent=5 // pred_check_branch
        %2426 = sbr.rel (%p2424) target = $region64
      $region63: #{tpu_custom_call.1} parent=5 // pred_region
        %s2427 = ssub.s32 %s19, 2
        // Predicated region
        $region65: #{tpu_custom_call.1} parent=63 // pred_check
          %p2428 = pneg %p200
        $region66: #{tpu_custom_call.1} parent=63 // pred_check_branch
          %2430 = sbr.rel (%p2428) target = $region68
        $region67: #{tpu_custom_call.1} parent=63 // pred_region
          %s2431 = sand.u32 %s185, 1
          %s2432 = scalar_lea.sflag [#allocation6], %s2431
          %s2433 = sand.u32 %s185, 1
          %s2434 = smul.addr %s2433, 64
          %s2435 = scalar_lea.vmem [#allocation9], %s2434
          %2436 = dma.done %s2432, 1024
        $region68: #{tpu_custom_call.1} parent=63 // pred_fallthru
          _
      $region64: #{tpu_custom_call.1} parent=5 // pred_fallthru
        _
    $region6: #{tpu_custom_call.1} parent=1 // loop_footer
      %s23 = sadd.s32 1, %s19
    $region7: #{tpu_custom_call.1} parent=1 // loop_footer_branch
      %18 = sbr.rel target = $region3
    $region8: #{tpu_custom_call.1} parent=1 // loop_exit
      _
    %2437 = vsyncpa [#allocation5], 1
    %s2438 = scalar_lea.sflag [#allocation5], 1
    %2439 = vsyncpa %s2438, 1
    %2440 = vsyncpa [#allocation8], 1
    %2441 = vsyncpa [#allocation6], 1
    %s2442 = scalar_lea.sflag [#allocation6], 1
    %2443 = vsyncpa %s2442, 1

</llo_original>
